<compile_context>
chip_gen: v6e
topology: v6e:2x2x1
jax: 0.10.0
libtpu: 0.0.40
codegen_flags: <defaults>
</compile_context>

<pallas_src>
import jax
import jax.numpy as jnp
from jax.experimental import pallas as pl
from jax.experimental.pallas import tpu as pltpu

# ---------------- model hyper-parameters (stand-ins for argparse opts) -------
NUM_CLASSES = 10
CHANNELS = 1
IMG_SIZE = 16
HIDDEN = 512

LANE = 128
IMG_FLAT = CHANNELS * IMG_SIZE * IMG_SIZE                   # 256


def _round_up(x, m):
    return ((x + m - 1) // m) * m


IMG_FLAT_PAD = _round_up(IMG_FLAT, LANE)                    # 256 (lane-aligned)
NUM_CLASSES_PAD = _round_up(NUM_CLASSES, 16)                # 16 (bf16 sublane pack)
OUT_PAD = LANE                                              # lane-dense output slab


# ---------------------------- Pallas kernel ----------------------------------
def _disc_mlp_kernel(lab_ref, x_img_ref,
                     w1i_ref, t_emb_ref, b_ref,
                     w2_ref, w3_ref, w4_ref,
                     out_ref):
    """One batch tile: 3 big + 1 tiny bf16 MXU matmuls, bf16 bias+LeakyReLU epilogue."""

    def leaky(h):                       # LeakyReLU(0.2) == max(h, 0.2*h)
        return jnp.maximum(h, 0.2 * h)

    tb = x_img_ref.shape[0]
    x = x_img_ref[...].astype(jnp.bfloat16)                        # (TB, 256)

    # Layer 1 -- torch's cat([img_flat, emb(labels)]) @ W1 computed as
    #   img_flat @ W1_img  +  onehot(labels) @ T,  with T = emb_table @ W1_emb
    # precomputed at init time (folded embedding path).
    lab = lab_ref[...]                                             # (TB, 1) int32
    cls = jax.lax.broadcasted_iota(jnp.int32, (tb, NUM_CLASSES_PAD), 1)
    onehot = (lab == cls).astype(jnp.bfloat16)                     # (TB, 16)

    h = (jnp.dot(x, w1i_ref[...], preferred_element_type=jnp.float32)
         + jnp.dot(onehot, t_emb_ref[...], preferred_element_type=jnp.float32))
    h = leaky(h.astype(jnp.bfloat16) + b_ref[0:1, :])              # bf16 epilogue

    # Layer 2 (Dropout(0.4) -> identity, eval mode)
    h = jnp.dot(h, w2_ref[...], preferred_element_type=jnp.float32)
    h = leaky(h.astype(jnp.bfloat16) + b_ref[1:2, :])

    # Layer 3 (Dropout(0.4) -> identity, eval mode)
    h = jnp.dot(h, w3_ref[...], preferred_element_type=jnp.float32)
    h = leaky(h.astype(jnp.bfloat16) + b_ref[2:3, :])

    # Layer 4 -- lane-dense (TB, 128) output; only column 0 is meaningful.
    out = jnp.dot(h, w4_ref[...], preferred_element_type=jnp.float32)
    out_ref[...] = out + b_ref[3:4, :OUT_PAD].astype(jnp.float32)


# ------------------------------- wrapper --------------------------------------
def _pick_tb(B):
    if B <= 512:
        return _round_up(B, 16)          # single grid step, minimal padding
    # Large batches: prefer big tiles (amortize ~0.35us per-step overhead),
    # but minimize padding waste; all candidates are 128-multiples (v5e MXU).
    return min((512, 256, 128), key=lambda t: (_round_up(B, t) - B, -t))


def discriminator_forward(img, labels, params):
    """img: (B, C, H, W) float32 NCHW; labels: (B,) int32. Returns (B, 1) f32."""
    B = img.shape[0]

    # Contiguous reshape only (same row-major order as torch .view); bf16 cast
    # happens inside the kernel so no extra HBM copy is materialized here.
    img_flat = img.reshape(B, IMG_FLAT)                            # (B, 256) f32
    if IMG_FLAT_PAD > IMG_FLAT:
        img_flat = jnp.pad(img_flat, ((0, 0), (0, IMG_FLAT_PAD - IMG_FLAT)))
    labels_2d = labels.astype(jnp.int32).reshape(B, 1)             # (B, 1) int32

    TB = _pick_tb(B)
    B_pad = _round_up(B, TB)
    if B_pad > B:
        img_flat = jnp.pad(img_flat, ((0, B_pad - B), (0, 0)))
        labels_2d = jnp.pad(labels_2d, ((0, B_pad - B), (0, 0)))

    grid = (B_pad // TB,)

    def row_spec(shape):
        return pl.BlockSpec(shape, lambda i: (i, 0))

    def weight_spec(shape):
        # Constant block index -> weight is DMA'd once and stays VMEM-resident.
        return pl.BlockSpec(shape, lambda i: (0, 0))

    out = pl.pallas_call(
        _disc_mlp_kernel,
        out_shape=jax.ShapeDtypeStruct((B_pad, OUT_PAD), jnp.float32),
        grid=grid,
        in_specs=[
            row_spec((TB, 1)),                        # labels tile (int32)
            row_spec((TB, IMG_FLAT_PAD)),             # image tile (f32)
            weight_spec((IMG_FLAT_PAD, HIDDEN)),      # W1 (image rows), bf16
            weight_spec((NUM_CLASSES_PAD, HIDDEN)),   # T = emb @ W1_emb, bf16
            weight_spec((4, HIDDEN)),                 # packed biases b1..b4, bf16
            weight_spec((HIDDEN, HIDDEN)),            # W2, bf16
            weight_spec((HIDDEN, HIDDEN)),            # W3, bf16
            weight_spec((HIDDEN, OUT_PAD)),           # W4 (padded to 128 cols), bf16
        ],
        out_specs=row_spec((TB, OUT_PAD)),
        compiler_params=pltpu.CompilerParams(
            dimension_semantics=("parallel",)),       # shards batch across TCs on v7x
    )(labels_2d, img_flat,
      params["w1_img"], params["t_emb"], params["biases"],
      params["w2"], params["w3"], params["w4"])

    # Drop batch padding and keep only the real output column.
    return out[:B, :1]


# ---------------------------- parameter init ---------------------------------
def init_params(key):
    ks = jax.random.split(key, 10)

    def linear(kw, kb, fan_in, fan_out):
        bound = 1.0 / jnp.sqrt(jnp.float32(fan_in))
        w = jax.random.uniform(kw, (fan_in, fan_out), jnp.float32, -bound, bound)
        b = jax.random.uniform(kb, (1, fan_out), jnp.float32, -bound, bound)
        return w, b

    # Embedding table (torch nn.Embedding ~ N(0,1)).
    emb = jax.random.normal(ks[0], (NUM_CLASSES, NUM_CLASSES), jnp.float32)

    # Layer 1: torch layout is d_in = [img_flat, emb]; split the fan-in and
    # fold the embedding half:  T = emb_table @ W1_emb  (computed once in f32).
    w1, b1 = linear(ks[1], ks[2], IMG_FLAT + NUM_CLASSES, HIDDEN)
    w1_img = w1[:IMG_FLAT]
    if IMG_FLAT_PAD > IMG_FLAT:
        w1_img = jnp.pad(w1_img, ((0, IMG_FLAT_PAD - IMG_FLAT), (0, 0)))
    w1_img = w1_img.astype(jnp.bfloat16)
    t_emb = (emb @ w1[IMG_FLAT:]).astype(jnp.bfloat16)              # (10, 512)
    t_emb = jnp.pad(t_emb, ((0, NUM_CLASSES_PAD - NUM_CLASSES), (0, 0)))

    w2, b2 = linear(ks[3], ks[4], HIDDEN, HIDDEN)
    w3, b3 = linear(ks[5], ks[6], HIDDEN, HIDDEN)
    w4, b4 = linear(ks[7], ks[8], HIDDEN, 1)
    # Lane-dense final layer: pad the single output column to 128 (zeros).
    w4 = jnp.pad(w4, ((0, 0), (0, OUT_PAD - 1))).astype(jnp.bfloat16)
    b4_row = jnp.pad(b4, ((0, 0), (0, HIDDEN - 1)))                 # (1, 512)

    # Pack the four biases into one (4, 512) bf16 array (row 3 = padded b4).
    biases = jnp.concatenate([b1, b2, b3, b4_row], axis=0).astype(jnp.bfloat16)

    return {
        "w1_img": w1_img,
        "t_emb": t_emb,
        "biases": biases,
        "w2": w2.astype(jnp.bfloat16),
        "w3": w3.astype(jnp.bfloat16),
        "w4": w4,
    }


# -------------------------------- main ----------------------------------------
if __name__ == "__main__":
    key = jax.random.PRNGKey(0)
    k_img, k_lbl, k_par = jax.random.split(key, 3)

    B = 8
    img = jax.random.normal(k_img, (B, CHANNELS, IMG_SIZE, IMG_SIZE), jnp.float32)
    labels = jax.random.randint(k_lbl, (B,), 0, NUM_CLASSES, dtype=jnp.int32)
    params = init_params(k_par)

    fwd = jax.jit(discriminator_forward)
    validity = fwd(img, labels, params)
    jax.block_until_ready(validity)

    assert validity.shape == (B, 1), validity.shape
    assert bool(jnp.all(jnp.isfinite(validity)))
    print("KERNEL_OK")
</pallas_src>

<mosaic_0001>
module attributes {stable_mosaic.version = 11 : i64} {
  func.func @_disc_mlp_kernel(%arg0: i32, %arg1: memref<16x1xi32, #tpu.memory_space<vmem>>, %arg2: memref<16x256xf32, #tpu.memory_space<vmem>>, %arg3: memref<256x512xbf16, #tpu.memory_space<vmem>>, %arg4: memref<16x512xbf16, #tpu.memory_space<vmem>>, %arg5: memref<4x512xbf16, #tpu.memory_space<vmem>>, %arg6: memref<512x512xbf16, #tpu.memory_space<vmem>>, %arg7: memref<512x512xbf16, #tpu.memory_space<vmem>>, %arg8: memref<512x128xbf16, #tpu.memory_space<vmem>>, %arg9: memref<16x128xf32, #tpu.memory_space<vmem>>) attributes {dimension_semantics = [#tpu.dimension_semantics<parallel>], iteration_bounds = array<i64: 1>, scalar_prefetch = 0 : i64, scratch_operands = 0 : i64, tpu.core_type = #tpu.core_type<tc>, window_params = [{transform_indices = @transform_0, window_bounds = array<i64: 16, 1>}, {transform_indices = @transform_1, window_bounds = array<i64: 16, 256>}, {pipeline_mode = #tpu.pipeline_mode<synchronous>, transform_indices = @transform_2, window_bounds = array<i64: 256, 512>}, {pipeline_mode = #tpu.pipeline_mode<synchronous>, transform_indices = @transform_3, window_bounds = array<i64: 16, 512>}, {pipeline_mode = #tpu.pipeline_mode<synchronous>, transform_indices = @transform_4, window_bounds = array<i64: 4, 512>}, {pipeline_mode = #tpu.pipeline_mode<synchronous>, transform_indices = @transform_5, window_bounds = array<i64: 512, 512>}, {pipeline_mode = #tpu.pipeline_mode<synchronous>, transform_indices = @transform_6, window_bounds = array<i64: 512, 512>}, {pipeline_mode = #tpu.pipeline_mode<synchronous>, transform_indices = @transform_7, window_bounds = array<i64: 512, 128>}, {transform_indices = @transform_8, window_bounds = array<i64: 16, 128>}]} {
    %c0 = arith.constant 0 : index
    %c0_0 = arith.constant 0 : index
    %0 = vector.load %arg2[%c0, %c0_0] : memref<16x256xf32, #tpu.memory_space<vmem>>, vector<16x256xf32>
    %1 = arith.truncf %0 : vector<16x256xf32> to vector<16x256xbf16>
    %c0_1 = arith.constant 0 : index
    %c0_2 = arith.constant 0 : index
    %2 = vector.load %arg1[%c0_1, %c0_2] : memref<16x1xi32, #tpu.memory_space<vmem>>, vector<16x1xi32>
    %3 = tpu.iota {dimensions = array<i32: 1>} : vector<16x16xi32>
    %4 = vector.broadcast %2 : vector<16x1xi32> to vector<16x16xi32>
    %5 = arith.cmpi eq, %4, %3 : vector<16x16xi32>
    %6 = arith.extui %5 : vector<16x16xi1> to vector<16x16xi32>
    %7 = arith.sitofp %6 : vector<16x16xi32> to vector<16x16xf32>
    %8 = arith.truncf %7 : vector<16x16xf32> to vector<16x16xbf16>
    %c0_3 = arith.constant 0 : index
    %c0_4 = arith.constant 0 : index
    %9 = vector.load %arg3[%c0_3, %c0_4] : memref<256x512xbf16, #tpu.memory_space<vmem>>, vector<256x512xbf16>
    %cst = arith.constant dense<0.000000e+00> : vector<16x512xf32>
    %10 = tpu.matmul %1, %9, %cst {dimension_numbers = #tpu.dot_dimension_numbers<[1], [0], [0], [1], [0, 0, 1, 1], [], []>} : vector<16x256xbf16>, vector<256x512xbf16>, vector<16x512xf32> -> vector<16x512xf32>
    %c0_5 = arith.constant 0 : index
    %c0_6 = arith.constant 0 : index
    %11 = vector.load %arg4[%c0_5, %c0_6] : memref<16x512xbf16, #tpu.memory_space<vmem>>, vector<16x512xbf16>
    %cst_7 = arith.constant dense<0.000000e+00> : vector<16x512xf32>
    %12 = tpu.matmul %8, %11, %cst_7 {dimension_numbers = #tpu.dot_dimension_numbers<[1], [0], [0], [1], [0, 0, 1, 1], [], []>} : vector<16x16xbf16>, vector<16x512xbf16>, vector<16x512xf32> -> vector<16x512xf32>
    %13 = arith.addf %10, %12 : vector<16x512xf32>
    %14 = arith.truncf %13 : vector<16x512xf32> to vector<16x512xbf16>
    %c0_8 = arith.constant 0 : index
    %c0_9 = arith.constant 0 : index
    %15 = vector.load %arg5[%c0_8, %c0_9] : memref<4x512xbf16, #tpu.memory_space<vmem>>, vector<1x512xbf16>
    %16 = vector.broadcast %15 : vector<1x512xbf16> to vector<16x512xbf16>
    %17 = arith.addf %14, %16 : vector<16x512xbf16>
    %cst_10 = arith.constant 2.001950e-01 : bf16
    %18 = vector.broadcast %cst_10 : bf16 to vector<16x512xbf16>
    %19 = arith.mulf %18, %17 : vector<16x512xbf16>
    %20 = arith.maximumf %17, %19 : vector<16x512xbf16>
    %c0_11 = arith.constant 0 : index
    %c0_12 = arith.constant 0 : index
    %21 = vector.load %arg6[%c0_11, %c0_12] : memref<512x512xbf16, #tpu.memory_space<vmem>>, vector<512x512xbf16>
    %cst_13 = arith.constant dense<0.000000e+00> : vector<16x512xf32>
    %22 = tpu.matmul %20, %21, %cst_13 {dimension_numbers = #tpu.dot_dimension_numbers<[1], [0], [0], [1], [0, 0, 1, 1], [], []>} : vector<16x512xbf16>, vector<512x512xbf16>, vector<16x512xf32> -> vector<16x512xf32>
    %23 = arith.truncf %22 : vector<16x512xf32> to vector<16x512xbf16>
    %c1 = arith.constant 1 : index
    %c0_14 = arith.constant 0 : index
    %24 = vector.load %arg5[%c1, %c0_14] : memref<4x512xbf16, #tpu.memory_space<vmem>>, vector<1x512xbf16>
    %25 = vector.broadcast %24 : vector<1x512xbf16> to vector<16x512xbf16>
    %26 = arith.addf %23, %25 : vector<16x512xbf16>
    %cst_15 = arith.constant 2.001950e-01 : bf16
    %27 = vector.broadcast %cst_15 : bf16 to vector<16x512xbf16>
    %28 = arith.mulf %27, %26 : vector<16x512xbf16>
    %29 = arith.maximumf %26, %28 : vector<16x512xbf16>
    %c0_16 = arith.constant 0 : index
    %c0_17 = arith.constant 0 : index
    %30 = vector.load %arg7[%c0_16, %c0_17] : memref<512x512xbf16, #tpu.memory_space<vmem>>, vector<512x512xbf16>
    %cst_18 = arith.constant dense<0.000000e+00> : vector<16x512xf32>
    %31 = tpu.matmul %29, %30, %cst_18 {dimension_numbers = #tpu.dot_dimension_numbers<[1], [0], [0], [1], [0, 0, 1, 1], [], []>} : vector<16x512xbf16>, vector<512x512xbf16>, vector<16x512xf32> -> vector<16x512xf32>
    %32 = arith.truncf %31 : vector<16x512xf32> to vector<16x512xbf16>
    %c2 = arith.constant 2 : index
    %c0_19 = arith.constant 0 : index
    %33 = vector.load %arg5[%c2, %c0_19] : memref<4x512xbf16, #tpu.memory_space<vmem>>, vector<1x512xbf16>
    %34 = vector.broadcast %33 : vector<1x512xbf16> to vector<16x512xbf16>
    %35 = arith.addf %32, %34 : vector<16x512xbf16>
    %cst_20 = arith.constant 2.001950e-01 : bf16
    %36 = vector.broadcast %cst_20 : bf16 to vector<16x512xbf16>
    %37 = arith.mulf %36, %35 : vector<16x512xbf16>
    %38 = arith.maximumf %35, %37 : vector<16x512xbf16>
    %c0_21 = arith.constant 0 : index
    %c0_22 = arith.constant 0 : index
    %39 = vector.load %arg8[%c0_21, %c0_22] : memref<512x128xbf16, #tpu.memory_space<vmem>>, vector<512x128xbf16>
    %cst_23 = arith.constant dense<0.000000e+00> : vector<16x128xf32>
    %40 = tpu.matmul %38, %39, %cst_23 {dimension_numbers = #tpu.dot_dimension_numbers<[1], [0], [0], [1], [0, 0, 1, 1], [], []>} : vector<16x512xbf16>, vector<512x128xbf16>, vector<16x128xf32> -> vector<16x128xf32>
    %c3 = arith.constant 3 : index
    %c0_24 = arith.constant 0 : index
    %41 = vector.load %arg5[%c3, %c0_24] : memref<4x512xbf16, #tpu.memory_space<vmem>>, vector<1x128xbf16>
    %42 = arith.extf %41 : vector<1x128xbf16> to vector<1x128xf32>
    %43 = vector.broadcast %42 : vector<1x128xf32> to vector<16x128xf32>
    %44 = arith.addf %40, %43 : vector<16x128xf32>
    %c0_25 = arith.constant 0 : index
    %c0_26 = arith.constant 0 : index
    %45 = vector.load %arg9[%c0_25, %c0_26] : memref<16x128xf32, #tpu.memory_space<vmem>>, vector<16x128xf32>
    tpu.vector_store %arg9[%c0_25, %c0_26], %44 {strides = array<i32>} : memref<16x128xf32, #tpu.memory_space<vmem>>, vector<16x128xf32>,
    return
  }
  func.func @transform_0(%arg0: i32) -> (i32, i32) {
    %c0_i32 = arith.constant 0 : i32
    %c0_i32_0 = arith.constant 0 : i32
    return %arg0, %c0_i32 : i32, i32
  }
  func.func @transform_1(%arg0: i32) -> (i32, i32) {
    %c0_i32 = arith.constant 0 : i32
    %c0_i32_0 = arith.constant 0 : i32
    return %arg0, %c0_i32 : i32, i32
  }
  func.func @transform_2(%arg0: i32) -> (i32, i32) {
    %c0_i32 = arith.constant 0 : i32
    %c0_i32_0 = arith.constant 0 : i32
    %c0_i32_1 = arith.constant 0 : i32
    return %c0_i32, %c0_i32_0 : i32, i32
  }
  func.func @transform_3(%arg0: i32) -> (i32, i32) {
    %c0_i32 = arith.constant 0 : i32
    %c0_i32_0 = arith.constant 0 : i32
    %c0_i32_1 = arith.constant 0 : i32
    return %c0_i32, %c0_i32_0 : i32, i32
  }
  func.func @transform_4(%arg0: i32) -> (i32, i32) {
    %c0_i32 = arith.constant 0 : i32
    %c0_i32_0 = arith.constant 0 : i32
    %c0_i32_1 = arith.constant 0 : i32
    return %c0_i32, %c0_i32_0 : i32, i32
  }
  func.func @transform_5(%arg0: i32) -> (i32, i32) {
    %c0_i32 = arith.constant 0 : i32
    %c0_i32_0 = arith.constant 0 : i32
    %c0_i32_1 = arith.constant 0 : i32
    return %c0_i32, %c0_i32_0 : i32, i32
  }
  func.func @transform_6(%arg0: i32) -> (i32, i32) {
    %c0_i32 = arith.constant 0 : i32
    %c0_i32_0 = arith.constant 0 : i32
    %c0_i32_1 = arith.constant 0 : i32
    return %c0_i32, %c0_i32_0 : i32, i32
  }
  func.func @transform_7(%arg0: i32) -> (i32, i32) {
    %c0_i32 = arith.constant 0 : i32
    %c0_i32_0 = arith.constant 0 : i32
    %c0_i32_1 = arith.constant 0 : i32
    return %c0_i32, %c0_i32_0 : i32, i32
  }
  func.func @transform_8(%arg0: i32) -> (i32, i32) {
    %c0_i32 = arith.constant 0 : i32
    %c0_i32_0 = arith.constant 0 : i32
    return %arg0, %c0_i32 : i32, i32
  }
}

</mosaic_0001>

<llo_original>
// kernel: discriminator_forward.1
$region0: #{discriminator_forward.1}
  #allocation0 [shape = 'u32[]', space=smem, size = 0x4, offset = 0x4, fixed_abs, tag = 'smem constant byte address 0x4 - core index']
  #allocation1 [shape = 'u32[144,128]{1,0:T(1,128)}', space=vmem, size = 0x12000, scoped, tag = 'internal scratch']
  %s0 = inlined_call_operand.vmem [shape: s32[16,1], index: 0, kind: input, shape index: {}]
  %s1 = inlined_call_operand.vmem [shape: f32[16,256], index: 1, kind: input, shape index: {}]
  %s2 = inlined_call_operand.hbm [shape: bf16[256,512], index: 2, kind: input, shape index: {}]
  %s3 = inlined_call_operand.vmem [shape: bf16[16,512], index: 3, kind: input, shape index: {}]
  %s4 = inlined_call_operand.vmem [shape: bf16[4,512], index: 4, kind: input, shape index: {}]
  %s5 = inlined_call_operand.hbm [shape: bf16[512,512], index: 5, kind: input, shape index: {}]
  %s6 = inlined_call_operand.hbm [shape: bf16[512,512], index: 6, kind: input, shape index: {}]
  %s7 = inlined_call_operand.hbm [shape: bf16[512,128], index: 7, kind: input, shape index: {}]
  %s8 = inlined_call_operand.vmem [shape: f32[16,128], index: 8, kind: output, shape index: {}]
  %s9 = sld [smem:[#allocation0]]
  $region58: #{discriminator_forward.1} parent=0
    _
  %s11 = ssub.s32 1, %s9
  %s12 = scalar_select 0, %s11, %s9
  $region1: #{discriminator_forward.1} parent=0
    #allocation2 [shape = 'u8[262144]{0}', space=vmem, size = 0x40000, scoped, tag = 'input window, operand 2, single buffered']
    #allocation3 [shape = 's32[1]{0}', space=sflag, size = 0x4, scoped, tag = 'scoped memory for discriminator_forward.1']
    #allocation4 [shape = 'u8[524288]{0}', space=vmem, size = 0x80000, scoped, tag = 'input window, operand 5, single buffered']
    #allocation5 [shape = 's32[1]{0}', space=sflag, size = 0x4, scoped, tag = 'scoped memory for discriminator_forward.1']
    #allocation6 [shape = 'u8[524288]{0}', space=vmem, size = 0x80000, scoped, tag = 'input window, operand 6, single buffered']
    #allocation7 [shape = 'u8[131072]{0}', space=vmem, size = 0x20000, scoped, tag = 'input window, operand 7, single buffered']
    #allocation8 [shape = 's32[1]{0}', space=sflag, size = 0x4, scoped, tag = 'scoped memory for discriminator_forward.1']
    %13 = vsyncpa [#allocation3], 0
    %14 = vsyncpa [#allocation5], 0
    %15 = vsyncpa [#allocation8], 0
    // Predicated region
    $region2: #{discriminator_forward.1} parent=1 // pred_check
      _
    $region3: #{discriminator_forward.1} parent=1 // pred_check_branch
      %17 = sbr.rel (0) target = $region5
    $region4: #{discriminator_forward.1} parent=1 // pred_region
      _
    $region5: #{discriminator_forward.1} parent=1 // pred_fallthru
      _
    // Predicated region
    $region6: #{discriminator_forward.1} parent=1 // pred_check
      _
    $region7: #{discriminator_forward.1} parent=1 // pred_check_branch
      %19 = sbr.rel (0) target = $region9
    $region8: #{discriminator_forward.1} parent=1 // pred_region
      _
    $region9: #{discriminator_forward.1} parent=1 // pred_fallthru
      _
    // Predicated region
    $region10: #{discriminator_forward.1} parent=1 // pred_check
      _
    $region11: #{discriminator_forward.1} parent=1 // pred_check_branch
      %21 = sbr.rel (0) target = $region13
    $region12: #{discriminator_forward.1} parent=1 // pred_region
      %s23 = ssub.s32 8192, 8192
      %24 = vsyncadd [#allocation3], %s23
      %s25 = sshll.u32 [#allocation2], 4
      %s26 = int_to_ptr.vmem [resolvable:$true] %s25
      %31 = dma.hbm_to_vmem [thread:$0]  %s2, 8192, %s26, [#allocation3], 256, 256, 16
    $region13: #{discriminator_forward.1} parent=1 // pred_fallthru
      _
    // Predicated region
    $region14: #{discriminator_forward.1} parent=1 // pred_check
      _
    $region15: #{discriminator_forward.1} parent=1 // pred_check_branch
      %33 = sbr.rel (0) target = $region17
    $region16: #{discriminator_forward.1} parent=1 // pred_region
      _
    $region17: #{discriminator_forward.1} parent=1 // pred_fallthru
      _
    // Predicated region
    $region18: #{discriminator_forward.1} parent=1 // pred_check
      _
    $region19: #{discriminator_forward.1} parent=1 // pred_check_branch
      %35 = sbr.rel (0) target = $region21
    $region20: #{discriminator_forward.1} parent=1 // pred_region
      _
    $region21: #{discriminator_forward.1} parent=1 // pred_fallthru
      _
    // Predicated region
    $region22: #{discriminator_forward.1} parent=1 // pred_check
      _
    $region23: #{discriminator_forward.1} parent=1 // pred_check_branch
      %37 = sbr.rel (0) target = $region25
    $region24: #{discriminator_forward.1} parent=1 // pred_region
      %s39 = ssub.s32 16384, 16384
      %40 = vsyncadd [#allocation5], %s39
      %s41 = sshll.u32 [#allocation4], 4
      %s42 = int_to_ptr.vmem [resolvable:$true] %s41
      %47 = dma.hbm_to_vmem [thread:$0]  %s5, 16384, %s42, [#allocation5], 256, 256, 16
    $region25: #{discriminator_forward.1} parent=1 // pred_fallthru
      _
    // Predicated region
    $region26: #{discriminator_forward.1} parent=1 // pred_check
      _
    $region27: #{discriminator_forward.1} parent=1 // pred_check_branch
      %49 = sbr.rel (0) target = $region29
    $region28: #{discriminator_forward.1} parent=1 // pred_region
      %s51 = ssub.s32 16384, 16384
      %52 = vsyncadd [#allocation5], %s51
      %s53 = sshll.u32 [#allocation6], 4
      %s54 = int_to_ptr.vmem [resolvable:$true] %s53
      %59 = dma.hbm_to_vmem [thread:$0]  %s6, 16384, %s54, [#allocation5], 256, 256, 16
    $region29: #{discriminator_forward.1} parent=1 // pred_fallthru
      _
    // Predicated region
    $region30: #{discriminator_forward.1} parent=1 // pred_check
      _
    $region31: #{discriminator_forward.1} parent=1 // pred_check_branch
      %61 = sbr.rel (0) target = $region33
    $region32: #{discriminator_forward.1} parent=1 // pred_region
      %s63 = ssub.s32 4096, 4096
      %64 = vsyncadd [#allocation8], %s63
      %s65 = sshll.u32 [#allocation7], 4
      %s66 = int_to_ptr.vmem [resolvable:$true] %s65
      %71 = dma.hbm_to_vmem [thread:$0]  %s7, 4096, %s66, [#allocation8], 64, 64, 4
    $region33: #{discriminator_forward.1} parent=1 // pred_fallthru
      _
    // Predicated region
    $region34: #{discriminator_forward.1} parent=1 // pred_check
      _
    $region35: #{discriminator_forward.1} parent=1 // pred_check_branch
      %73 = sbr.rel (0) target = $region37
    $region36: #{discriminator_forward.1} parent=1 // pred_region
      %74 = dma.done [#allocation3], 8192
    $region37: #{discriminator_forward.1} parent=1 // pred_fallthru
      _
    // Predicated region
    $region38: #{discriminator_forward.1} parent=1 // pred_check
      _
    $region39: #{discriminator_forward.1} parent=1 // pred_check_branch
      %76 = sbr.rel (0) target = $region41
    $region40: #{discriminator_forward.1} parent=1 // pred_region
      %77 = dma.done [#allocation5], 16384
    $region41: #{discriminator_forward.1} parent=1 // pred_fallthru
      _
    // Predicated region
    $region42: #{discriminator_forward.1} parent=1 // pred_check
      _
    $region43: #{discriminator_forward.1} parent=1 // pred_check_branch
      %79 = sbr.rel (0) target = $region45
    $region44: #{discriminator_forward.1} parent=1 // pred_region
      %80 = dma.done [#allocation5], 16384
    $region45: #{discriminator_forward.1} parent=1 // pred_fallthru
      _
    // Predicated region
    $region46: #{discriminator_forward.1} parent=1 // pred_check
      _
    $region47: #{discriminator_forward.1} parent=1 // pred_check_branch
      %82 = sbr.rel (0) target = $region49
    $region48: #{discriminator_forward.1} parent=1 // pred_region
      %83 = dma.done [#allocation8], 4096
    $region49: #{discriminator_forward.1} parent=1 // pred_fallthru
      _
    %v86 = vld [vmem:[%s1] sm:$0xff]
    %v87 = vld [vmem:[%s1 + $0x8] sm:$0xff]
    %v88 = vld [vmem:[%s1 + $0x10] sm:$0xff]
    %v89 = vld [vmem:[%s1 + $0x18] sm:$0xff]
    %v90 = vpack.c.bf16 %v88, %v86
    %v91 = vpack.c.bf16 %v89, %v87
    %v92 = vld [vmem:[%s0] sm:$0xff]
    %v93 = vld [vmem:[%s0 + $0x8] sm:$0xff]
    %v94 = vlaneseq
    %v95 = vand.u32 %v94, 127
    %96 = vset.pattern.permute.xlu0 0
    %97 = vperm.xlu0 %96, %v92
    %v98 = vpop.permute.xlu0 %97
    %99 = vset.pattern.permute.xlu0 0
    %100 = vperm.xlu0 %99, %v93
    %v101 = vpop.permute.xlu0 %100
    %vm102 = vcmp.eq.s32.totalorder %v98, %v95
    %vm103 = vcmp.eq.s32.totalorder %v101, %v95
    %v104 = vsel %vm102, 1, 0
    %v105 = vsel %vm103, 1, 0
    %v106 = vcvt.s32.f32 %v104
    %v107 = vcvt.s32.f32 %v105
    %v108 = vpack.c.bf16 %v107, %v106
    %v109 = vld [vmem:[#allocation2] sm:$0xff]
    %v110 = vld [vmem:[#allocation2 + $0x8] sm:$0xff]
    %v111 = vld [vmem:[#allocation2 + $0x10] sm:$0xff]
    %v112 = vld [vmem:[#allocation2 + $0x18] sm:$0xff]
    %v113 = vld [vmem:[#allocation2 + $0x20] sm:$0xff]
    %v114 = vld [vmem:[#allocation2 + $0x28] sm:$0xff]
    %v115 = vld [vmem:[#allocation2 + $0x30] sm:$0xff]
    %v116 = vld [vmem:[#allocation2 + $0x38] sm:$0xff]
    %v117 = vld [vmem:[#allocation2 + $0x40] sm:$0xff]
    %v118 = vld [vmem:[#allocation2 + $0x48] sm:$0xff]
    %v119 = vld [vmem:[#allocation2 + $0x50] sm:$0xff]
    %v120 = vld [vmem:[#allocation2 + $0x58] sm:$0xff]
    %v121 = vld [vmem:[#allocation2 + $0x60] sm:$0xff]
    %v122 = vld [vmem:[#allocation2 + $0x68] sm:$0xff]
    %v123 = vld [vmem:[#allocation2 + $0x70] sm:$0xff]
    %v124 = vld [vmem:[#allocation2 + $0x78] sm:$0xff]
    %v125 = vld [vmem:[#allocation2 + $0x80] sm:$0xff]
    %v126 = vld [vmem:[#allocation2 + $0x88] sm:$0xff]
    %v127 = vld [vmem:[#allocation2 + $0x90] sm:$0xff]
    %v128 = vld [vmem:[#allocation2 + $0x98] sm:$0xff]
    %v129 = vld [vmem:[#allocation2 + $0xa0] sm:$0xff]
    %v130 = vld [vmem:[#allocation2 + $0xa8] sm:$0xff]
    %v131 = vld [vmem:[#allocation2 + $0xb0] sm:$0xff]
    %v132 = vld [vmem:[#allocation2 + $0xb8] sm:$0xff]
    %v133 = vld [vmem:[#allocation2 + $0xc0] sm:$0xff]
    %v134 = vld [vmem:[#allocation2 + $0xc8] sm:$0xff]
    %v135 = vld [vmem:[#allocation2 + $0xd0] sm:$0xff]
    %v136 = vld [vmem:[#allocation2 + $0xd8] sm:$0xff]
    %v137 = vld [vmem:[#allocation2 + $0xe0] sm:$0xff]
    %v138 = vld [vmem:[#allocation2 + $0xe8] sm:$0xff]
    %v139 = vld [vmem:[#allocation2 + $0xf0] sm:$0xff]
    %v140 = vld [vmem:[#allocation2 + $0xf8] sm:$0xff]
    %v141 = vld [vmem:[#allocation2 + $0x100] sm:$0xff]
    %v142 = vld [vmem:[#allocation2 + $0x108] sm:$0xff]
    %v143 = vld [vmem:[#allocation2 + $0x110] sm:$0xff]
    %v144 = vld [vmem:[#allocation2 + $0x118] sm:$0xff]
    %v145 = vld [vmem:[#allocation2 + $0x120] sm:$0xff]
    %v146 = vld [vmem:[#allocation2 + $0x128] sm:$0xff]
    %v147 = vld [vmem:[#allocation2 + $0x130] sm:$0xff]
    %v148 = vld [vmem:[#allocation2 + $0x138] sm:$0xff]
    %v149 = vld [vmem:[#allocation2 + $0x140] sm:$0xff]
    %v150 = vld [vmem:[#allocation2 + $0x148] sm:$0xff]
    %v151 = vld [vmem:[#allocation2 + $0x150] sm:$0xff]
    %v152 = vld [vmem:[#allocation2 + $0x158] sm:$0xff]
    %v153 = vld [vmem:[#allocation2 + $0x160] sm:$0xff]
    %v154 = vld [vmem:[#allocation2 + $0x168] sm:$0xff]
    %v155 = vld [vmem:[#allocation2 + $0x170] sm:$0xff]
    %v156 = vld [vmem:[#allocation2 + $0x178] sm:$0xff]
    %v157 = vld [vmem:[#allocation2 + $0x180] sm:$0xff]
    %v158 = vld [vmem:[#allocation2 + $0x188] sm:$0xff]
    %v159 = vld [vmem:[#allocation2 + $0x190] sm:$0xff]
    %v160 = vld [vmem:[#allocation2 + $0x198] sm:$0xff]
    %v161 = vld [vmem:[#allocation2 + $0x1a0] sm:$0xff]
    %v162 = vld [vmem:[#allocation2 + $0x1a8] sm:$0xff]
    %v163 = vld [vmem:[#allocation2 + $0x1b0] sm:$0xff]
    %v164 = vld [vmem:[#allocation2 + $0x1b8] sm:$0xff]
    %v165 = vld [vmem:[#allocation2 + $0x1c0] sm:$0xff]
    %v166 = vld [vmem:[#allocation2 + $0x1c8] sm:$0xff]
    %v167 = vld [vmem:[#allocation2 + $0x1d0] sm:$0xff]
    %v168 = vld [vmem:[#allocation2 + $0x1d8] sm:$0xff]
    %v169 = vld [vmem:[#allocation2 + $0x1e0] sm:$0xff]
    %v170 = vld [vmem:[#allocation2 + $0x1e8] sm:$0xff]
    %v171 = vld [vmem:[#allocation2 + $0x1f0] sm:$0xff]
    %v172 = vld [vmem:[#allocation2 + $0x1f8] sm:$0xff]
    %v173 = vld [vmem:[%s3] sm:$0xff]
    %v174 = vld [vmem:[%s3 + $0x8] sm:$0xff]
    %v175 = vld [vmem:[%s3 + $0x10] sm:$0xff]
    %v176 = vld [vmem:[%s3 + $0x18] sm:$0xff]
    %v181 = vunpack.c.l.b16 %v173
    %v182 = vunpack.c.h.b16 %v173
    %v183 = vunpack.c.l.b16 %v174
    %v184 = vunpack.c.h.b16 %v174
    %v185 = vunpack.c.l.b16 %v175
    %v186 = vunpack.c.h.b16 %v175
    %v187 = vunpack.c.l.b16 %v176
    %v188 = vunpack.c.h.b16 %v176
    %v189 = vpack.c.b16 %v185, %v181
    %v190 = vpack.c.b16 %v186, %v182
    %v191 = vpack.c.b16 %v187, %v183
    %v192 = vpack.c.b16 %v188, %v184
    %vm197 = vcmask 130048
    %v199 = vsel %vm197, %v108, 0
    %201 = vmatprep.subr.bf16.mxu0 0
    %202 = vmatpush1.bf16.msra.mxu0 0
    %203 = vmatprep.subr.bf16.mxu0 0
    %204 = vmatpush1.bf16.msra.mxu0 0
    %205 = vmatprep.subr.bf16.mxu0 0
    %206 = vmatpush1.bf16.msra.mxu0 0
    %207 = vmatprep.subr.bf16.mxu0 0
    %208 = vmatpush1.bf16.msra.mxu0 0
    %209 = vmatprep.subr.bf16.mxu0 0
    %210 = vmatpush1.bf16.msra.mxu0 0
    %211 = vmatprep.subr.bf16.mxu0 0
    %212 = vmatpush1.bf16.msra.mxu0 0
    %213 = vmatprep.subr.bf16.mxu0 0
    %214 = vmatpush1.bf16.msra.mxu0 0
    %215 = vmatprep.subr.bf16.mxu0 %v190
    %216 = vmatpush1.bf16.msra.mxu0 %v189
    %217 = vmatprep.subr.bf16.mxu0 0
    %218 = vmatpush2.bf16.msra.mxu0 0
    %219 = vmatprep.subr.bf16.mxu0 0
    %220 = vmatpush2.bf16.msra.mxu0 0
    %221 = vmatprep.subr.bf16.mxu0 0
    %222 = vmatpush2.bf16.msra.mxu0 0
    %223 = vmatprep.subr.bf16.mxu0 0
    %224 = vmatpush2.bf16.msra.mxu0 0
    %225 = vmatprep.subr.bf16.mxu0 0
    %226 = vmatpush2.bf16.msra.mxu0 0
    %227 = vmatprep.subr.bf16.mxu0 0
    %228 = vmatpush2.bf16.msra.mxu0 0
    %229 = vmatprep.subr.bf16.mxu0 0
    %230 = vmatpush2.bf16.msra.mxu0 0
    %231 = vmatprep.subr.bf16.mxu0 0
    %232 = vmatpush2.bf16.msra.mxu0 0
    %233 = vmatprep.mubr.bf16.mxu0 0
    %234 = vmatmul.mubr.bf16.gmra.mxu0 %v199
    %v235 = vpop.f32.mrf.mxu0
    %v236 = vadd.f32 0.0, %v235
    %v237 = vpop.f32.mrf.mxu0
    %v238 = vadd.f32 0.0, %v237
    %v239 = vpop.f32.mrf.mxu0
    %v240 = vadd.f32 0.0, %v239
    %v241 = vpop.f32.mrf.mxu0
    %v242 = vadd.f32 0.0, %v241
    %243 = vdwg.mxu0
    %244 = vmatprep.subr.bf16.mxu0 0
    %245 = vmatpush1.bf16.msra.mxu0 0
    %246 = vmatprep.subr.bf16.mxu0 0
    %247 = vmatpush1.bf16.msra.mxu0 0
    %248 = vmatprep.subr.bf16.mxu0 0
    %249 = vmatpush1.bf16.msra.mxu0 0
    %250 = vmatprep.subr.bf16.mxu0 0
    %251 = vmatpush1.bf16.msra.mxu0 0
    %252 = vmatprep.subr.bf16.mxu0 0
    %253 = vmatpush1.bf16.msra.mxu0 0
    %254 = vmatprep.subr.bf16.mxu0 0
    %255 = vmatpush1.bf16.msra.mxu0 0
    %256 = vmatprep.subr.bf16.mxu0 0
    %257 = vmatpush1.bf16.msra.mxu0 0
    %258 = vmatprep.subr.bf16.mxu0 %v192
    %259 = vmatpush1.bf16.msra.mxu0 %v191
    %260 = vmatprep.subr.bf16.mxu0 0
    %261 = vmatpush2.bf16.msra.mxu0 0
    %262 = vmatprep.subr.bf16.mxu0 0
    %263 = vmatpush2.bf16.msra.mxu0 0
    %264 = vmatprep.subr.bf16.mxu0 0
    %265 = vmatpush2.bf16.msra.mxu0 0
    %266 = vmatprep.subr.bf16.mxu0 0
    %267 = vmatpush2.bf16.msra.mxu0 0
    %268 = vmatprep.subr.bf16.mxu0 0
    %269 = vmatpush2.bf16.msra.mxu0 0
    %270 = vmatprep.subr.bf16.mxu0 0
    %271 = vmatpush2.bf16.msra.mxu0 0
    %272 = vmatprep.subr.bf16.mxu0 0
    %273 = vmatpush2.bf16.msra.mxu0 0
    %274 = vmatprep.subr.bf16.mxu0 0
    %275 = vmatpush2.bf16.msra.mxu0 0
    %276 = vmatprep.mubr.bf16.mxu0 0
    %277 = vmatmul.mubr.bf16.gmra.mxu0 %v199
    %v278 = vpop.f32.mrf.mxu0
    %v279 = vadd.f32 0.0, %v278
    %v280 = vpop.f32.mrf.mxu0
    %v281 = vadd.f32 0.0, %v280
    %v282 = vpop.f32.mrf.mxu0
    %v283 = vadd.f32 0.0, %v282
    %v284 = vpop.f32.mrf.mxu0
    %v285 = vadd.f32 0.0, %v284
    %286 = vdwg.mxu0
    %v351 = vunpack.c.l.b16 %v109
    %v352 = vunpack.c.h.b16 %v109
    %v353 = vunpack.c.l.b16 %v110
    %v354 = vunpack.c.h.b16 %v110
    %v355 = vunpack.c.l.b16 %v111
    %v356 = vunpack.c.h.b16 %v111
    %v357 = vunpack.c.l.b16 %v112
    %v358 = vunpack.c.h.b16 %v112
    %v359 = vunpack.c.l.b16 %v113
    %v360 = vunpack.c.h.b16 %v113
    %v361 = vunpack.c.l.b16 %v114
    %v362 = vunpack.c.h.b16 %v114
    %v363 = vunpack.c.l.b16 %v115
    %v364 = vunpack.c.h.b16 %v115
    %v365 = vunpack.c.l.b16 %v116
    %v366 = vunpack.c.h.b16 %v116
    %v367 = vunpack.c.l.b16 %v117
    %v368 = vunpack.c.h.b16 %v117
    %v369 = vunpack.c.l.b16 %v118
    %v370 = vunpack.c.h.b16 %v118
    %v371 = vunpack.c.l.b16 %v119
    %v372 = vunpack.c.h.b16 %v119
    %v373 = vunpack.c.l.b16 %v120
    %v374 = vunpack.c.h.b16 %v120
    %v375 = vunpack.c.l.b16 %v121
    %v376 = vunpack.c.h.b16 %v121
    %v377 = vunpack.c.l.b16 %v122
    %v378 = vunpack.c.h.b16 %v122
    %v379 = vunpack.c.l.b16 %v123
    %v380 = vunpack.c.h.b16 %v123
    %v381 = vunpack.c.l.b16 %v124
    %v382 = vunpack.c.h.b16 %v124
    %v383 = vunpack.c.l.b16 %v125
    %v384 = vunpack.c.h.b16 %v125
    %v385 = vunpack.c.l.b16 %v126
    %v386 = vunpack.c.h.b16 %v126
    %v387 = vunpack.c.l.b16 %v127
    %v388 = vunpack.c.h.b16 %v127
    %v389 = vunpack.c.l.b16 %v128
    %v390 = vunpack.c.h.b16 %v128
    %v391 = vunpack.c.l.b16 %v129
    %v392 = vunpack.c.h.b16 %v129
    %v393 = vunpack.c.l.b16 %v130
    %v394 = vunpack.c.h.b16 %v130
    %v395 = vunpack.c.l.b16 %v131
    %v396 = vunpack.c.h.b16 %v131
    %v397 = vunpack.c.l.b16 %v132
    %v398 = vunpack.c.h.b16 %v132
    %v399 = vunpack.c.l.b16 %v133
    %v400 = vunpack.c.h.b16 %v133
    %v401 = vunpack.c.l.b16 %v134
    %v402 = vunpack.c.h.b16 %v134
    %v403 = vunpack.c.l.b16 %v135
    %v404 = vunpack.c.h.b16 %v135
    %v405 = vunpack.c.l.b16 %v136
    %v406 = vunpack.c.h.b16 %v136
    %v407 = vunpack.c.l.b16 %v137
    %v408 = vunpack.c.h.b16 %v137
    %v409 = vunpack.c.l.b16 %v138
    %v410 = vunpack.c.h.b16 %v138
    %v411 = vunpack.c.l.b16 %v139
    %v412 = vunpack.c.h.b16 %v139
    %v413 = vunpack.c.l.b16 %v140
    %v414 = vunpack.c.h.b16 %v140
    %v415 = vunpack.c.l.b16 %v141
    %v416 = vunpack.c.h.b16 %v141
    %v417 = vunpack.c.l.b16 %v142
    %v418 = vunpack.c.h.b16 %v142
    %v419 = vunpack.c.l.b16 %v143
    %v420 = vunpack.c.h.b16 %v143
    %v421 = vunpack.c.l.b16 %v144
    %v422 = vunpack.c.h.b16 %v144
    %v423 = vunpack.c.l.b16 %v145
    %v424 = vunpack.c.h.b16 %v145
    %v425 = vunpack.c.l.b16 %v146
    %v426 = vunpack.c.h.b16 %v146
    %v427 = vunpack.c.l.b16 %v147
    %v428 = vunpack.c.h.b16 %v147
    %v429 = vunpack.c.l.b16 %v148
    %v430 = vunpack.c.h.b16 %v148
    %v431 = vunpack.c.l.b16 %v149
    %v432 = vunpack.c.h.b16 %v149
    %v433 = vunpack.c.l.b16 %v150
    %v434 = vunpack.c.h.b16 %v150
    %v435 = vunpack.c.l.b16 %v151
    %v436 = vunpack.c.h.b16 %v151
    %v437 = vunpack.c.l.b16 %v152
    %v438 = vunpack.c.h.b16 %v152
    %v439 = vunpack.c.l.b16 %v153
    %v440 = vunpack.c.h.b16 %v153
    %v441 = vunpack.c.l.b16 %v154
    %v442 = vunpack.c.h.b16 %v154
    %v443 = vunpack.c.l.b16 %v155
    %v444 = vunpack.c.h.b16 %v155
    %v445 = vunpack.c.l.b16 %v156
    %v446 = vunpack.c.h.b16 %v156
    %v447 = vunpack.c.l.b16 %v157
    %v448 = vunpack.c.h.b16 %v157
    %v449 = vunpack.c.l.b16 %v158
    %v450 = vunpack.c.h.b16 %v158
    %v451 = vunpack.c.l.b16 %v159
    %v452 = vunpack.c.h.b16 %v159
    %v453 = vunpack.c.l.b16 %v160
    %v454 = vunpack.c.h.b16 %v160
    %v455 = vunpack.c.l.b16 %v161
    %v456 = vunpack.c.h.b16 %v161
    %v457 = vunpack.c.l.b16 %v162
    %v458 = vunpack.c.h.b16 %v162
    %v459 = vunpack.c.l.b16 %v163
    %v460 = vunpack.c.h.b16 %v163
    %v461 = vunpack.c.l.b16 %v164
    %v462 = vunpack.c.h.b16 %v164
    %v463 = vunpack.c.l.b16 %v165
    %v464 = vunpack.c.h.b16 %v165
    %v465 = vunpack.c.l.b16 %v166
    %v466 = vunpack.c.h.b16 %v166
    %v467 = vunpack.c.l.b16 %v167
    %v468 = vunpack.c.h.b16 %v167
    %v469 = vunpack.c.l.b16 %v168
    %v470 = vunpack.c.h.b16 %v168
    %v471 = vunpack.c.l.b16 %v169
    %v472 = vunpack.c.h.b16 %v169
    %v473 = vunpack.c.l.b16 %v170
    %v474 = vunpack.c.h.b16 %v170
    %v475 = vunpack.c.l.b16 %v171
    %v476 = vunpack.c.h.b16 %v171
    %v477 = vunpack.c.l.b16 %v172
    %v478 = vunpack.c.h.b16 %v172
    %v479 = vpack.c.b16 %v355, %v351
    %v480 = vpack.c.b16 %v356, %v352
    %v481 = vpack.c.b16 %v357, %v353
    %v482 = vpack.c.b16 %v358, %v354
    %v483 = vpack.c.b16 %v363, %v359
    %v484 = vpack.c.b16 %v364, %v360
    %v485 = vpack.c.b16 %v365, %v361
    %v486 = vpack.c.b16 %v366, %v362
    %v487 = vpack.c.b16 %v371, %v367
    %v488 = vpack.c.b16 %v372, %v368
    %v489 = vpack.c.b16 %v373, %v369
    %v490 = vpack.c.b16 %v374, %v370
    %v491 = vpack.c.b16 %v379, %v375
    %v492 = vpack.c.b16 %v380, %v376
    %v493 = vpack.c.b16 %v381, %v377
    %v494 = vpack.c.b16 %v382, %v378
    %v495 = vpack.c.b16 %v387, %v383
    %v496 = vpack.c.b16 %v388, %v384
    %v497 = vpack.c.b16 %v389, %v385
    %v498 = vpack.c.b16 %v390, %v386
    %v499 = vpack.c.b16 %v395, %v391
    %v500 = vpack.c.b16 %v396, %v392
    %v501 = vpack.c.b16 %v397, %v393
    %v502 = vpack.c.b16 %v398, %v394
    %v503 = vpack.c.b16 %v403, %v399
    %v504 = vpack.c.b16 %v404, %v400
    %v505 = vpack.c.b16 %v405, %v401
    %v506 = vpack.c.b16 %v406, %v402
    %v507 = vpack.c.b16 %v411, %v407
    %v508 = vpack.c.b16 %v412, %v408
    %v509 = vpack.c.b16 %v413, %v409
    %v510 = vpack.c.b16 %v414, %v410
    %v511 = vpack.c.b16 %v419, %v415
    %v512 = vpack.c.b16 %v420, %v416
    %v513 = vpack.c.b16 %v421, %v417
    %v514 = vpack.c.b16 %v422, %v418
    %v515 = vpack.c.b16 %v427, %v423
    %v516 = vpack.c.b16 %v428, %v424
    %v517 = vpack.c.b16 %v429, %v425
    %v518 = vpack.c.b16 %v430, %v426
    %v519 = vpack.c.b16 %v435, %v431
    %v520 = vpack.c.b16 %v436, %v432
    %v521 = vpack.c.b16 %v437, %v433
    %v522 = vpack.c.b16 %v438, %v434
    %v523 = vpack.c.b16 %v443, %v439
    %v524 = vpack.c.b16 %v444, %v440
    %v525 = vpack.c.b16 %v445, %v441
    %v526 = vpack.c.b16 %v446, %v442
    %v527 = vpack.c.b16 %v451, %v447
    %v528 = vpack.c.b16 %v452, %v448
    %v529 = vpack.c.b16 %v453, %v449
    %v530 = vpack.c.b16 %v454, %v450
    %v531 = vpack.c.b16 %v459, %v455
    %v532 = vpack.c.b16 %v460, %v456
    %v533 = vpack.c.b16 %v461, %v457
    %v534 = vpack.c.b16 %v462, %v458
    %v535 = vpack.c.b16 %v467, %v463
    %v536 = vpack.c.b16 %v468, %v464
    %v537 = vpack.c.b16 %v469, %v465
    %v538 = vpack.c.b16 %v470, %v466
    %v539 = vpack.c.b16 %v475, %v471
    %v540 = vpack.c.b16 %v476, %v472
    %v541 = vpack.c.b16 %v477, %v473
    %v542 = vpack.c.b16 %v478, %v474
    %607 = vmatprep.subr.bf16.mxu0 %v508
    %608 = vmatpush1.bf16.msra.mxu0 %v507
    %609 = vmatprep.subr.bf16.mxu0 %v504
    %610 = vmatpush1.bf16.msra.mxu0 %v503
    %611 = vmatprep.subr.bf16.mxu0 %v500
    %612 = vmatpush1.bf16.msra.mxu0 %v499
    %613 = vmatprep.subr.bf16.mxu0 %v496
    %614 = vmatpush1.bf16.msra.mxu0 %v495
    %615 = vmatprep.subr.bf16.mxu0 %v492
    %616 = vmatpush1.bf16.msra.mxu0 %v491
    %617 = vmatprep.subr.bf16.mxu0 %v488
    %618 = vmatpush1.bf16.msra.mxu0 %v487
    %619 = vmatprep.subr.bf16.mxu0 %v484
    %620 = vmatpush1.bf16.msra.mxu0 %v483
    %621 = vmatprep.subr.bf16.mxu0 %v480
    %622 = vmatpush1.bf16.msra.mxu0 %v479
    %623 = vmatprep.subr.bf16.mxu0 %v540
    %624 = vmatpush2.bf16.msra.mxu0 %v539
    %625 = vmatprep.subr.bf16.mxu0 %v536
    %626 = vmatpush2.bf16.msra.mxu0 %v535
    %627 = vmatprep.subr.bf16.mxu0 %v532
    %628 = vmatpush2.bf16.msra.mxu0 %v531
    %629 = vmatprep.subr.bf16.mxu0 %v528
    %630 = vmatpush2.bf16.msra.mxu0 %v527
    %631 = vmatprep.subr.bf16.mxu0 %v524
    %632 = vmatpush2.bf16.msra.mxu0 %v523
    %633 = vmatprep.subr.bf16.mxu0 %v520
    %634 = vmatpush2.bf16.msra.mxu0 %v519
    %635 = vmatprep.subr.bf16.mxu0 %v516
    %636 = vmatpush2.bf16.msra.mxu0 %v515
    %637 = vmatprep.subr.bf16.mxu0 %v512
    %638 = vmatpush2.bf16.msra.mxu0 %v511
    %639 = vmatprep.mubr.bf16.mxu0 %v91
    %640 = vmatmul.mubr.bf16.gmra.mxu0 %v90
    %v641 = vpop.f32.mrf.mxu0
    %v642 = vadd.f32 %v236, %v641
    %v643 = vpop.f32.mrf.mxu0
    %v644 = vadd.f32 %v238, %v643
    %v645 = vpop.f32.mrf.mxu0
    %v646 = vadd.f32 %v240, %v645
    %v647 = vpop.f32.mrf.mxu0
    %v648 = vadd.f32 %v242, %v647
    %649 = vdwg.mxu0
    %650 = vmatprep.subr.bf16.mxu0 %v510
    %651 = vmatpush1.bf16.msra.mxu0 %v509
    %652 = vmatprep.subr.bf16.mxu0 %v506
    %653 = vmatpush1.bf16.msra.mxu0 %v505
    %654 = vmatprep.subr.bf16.mxu0 %v502
    %655 = vmatpush1.bf16.msra.mxu0 %v501
    %656 = vmatprep.subr.bf16.mxu0 %v498
    %657 = vmatpush1.bf16.msra.mxu0 %v497
    %658 = vmatprep.subr.bf16.mxu0 %v494
    %659 = vmatpush1.bf16.msra.mxu0 %v493
    %660 = vmatprep.subr.bf16.mxu0 %v490
    %661 = vmatpush1.bf16.msra.mxu0 %v489
    %662 = vmatprep.subr.bf16.mxu0 %v486
    %663 = vmatpush1.bf16.msra.mxu0 %v485
    %664 = vmatprep.subr.bf16.mxu0 %v482
    %665 = vmatpush1.bf16.msra.mxu0 %v481
    %666 = vmatprep.subr.bf16.mxu0 %v542
    %667 = vmatpush2.bf16.msra.mxu0 %v541
    %668 = vmatprep.subr.bf16.mxu0 %v538
    %669 = vmatpush2.bf16.msra.mxu0 %v537
    %670 = vmatprep.subr.bf16.mxu0 %v534
    %671 = vmatpush2.bf16.msra.mxu0 %v533
    %672 = vmatprep.subr.bf16.mxu0 %v530
    %673 = vmatpush2.bf16.msra.mxu0 %v529
    %674 = vmatprep.subr.bf16.mxu0 %v526
    %675 = vmatpush2.bf16.msra.mxu0 %v525
    %676 = vmatprep.subr.bf16.mxu0 %v522
    %677 = vmatpush2.bf16.msra.mxu0 %v521
    %678 = vmatprep.subr.bf16.mxu0 %v518
    %679 = vmatpush2.bf16.msra.mxu0 %v517
    %680 = vmatprep.subr.bf16.mxu0 %v514
    %681 = vmatpush2.bf16.msra.mxu0 %v513
    %682 = vmatprep.mubr.bf16.mxu0 %v91
    %683 = vmatmul.mubr.bf16.gmra.mxu0 %v90
    %v684 = vpop.f32.mrf.mxu0
    %v685 = vadd.f32 %v279, %v684
    %v686 = vpop.f32.mrf.mxu0
    %v687 = vadd.f32 %v281, %v686
    %v688 = vpop.f32.mrf.mxu0
    %v689 = vadd.f32 %v283, %v688
    %v690 = vpop.f32.mrf.mxu0
    %v691 = vadd.f32 %v285, %v690
    %692 = vdwg.mxu0
    %v693 = vpack.c.bf16 %v646, %v642
    %v694 = vpack.c.bf16 %v648, %v644
    %v695 = vpack.c.bf16 %v689, %v685
    %v696 = vpack.c.bf16 %v691, %v687
    %v697 = vld [vmem:[%s4] sm:$0x55]
    %v699 = vcombine.high %v697, %v697
    %v701 = vunpack.c.l.s4 1983009808
    %v702 = vunpack.c.0.s8 %v701
    %v703 = vlaneseq
    %v704 = vshrl.u32 %v703, 7
    %v705 = vsub.s32 %v702, %v704
    %v706 = vrot.slane %v697, %v705
    %v708 = vunpack.c.l.s4 1983009808
    %v709 = vunpack.c.0.s8 %v708
    %v710 = vlaneseq
    %v711 = vshrl.u32 %v710, 7
    %v712 = vsub.s32 %v709, %v711
    %v713 = vrot.slane %v699, %v712
    %v714 = vcombine.high %v706, %v706
    %v715 = vcombine.high %v713, %v713
    %v717 = vpack.i.b16 %v706, %v706
    %v719 = vlaneseq
    %v720 = vshrl.u32 %v719, 7
    %v721 = vsub.s32 0, %v720
    %v722 = vrot.slane %v717, %v721
    %v724 = vpack.i.b16 %v714, %v714
    %v726 = vlaneseq
    %v727 = vshrl.u32 %v726, 7
    %v728 = vsub.s32 0, %v727
    %v729 = vrot.slane %v724, %v728
    %v731 = vpack.i.b16 %v713, %v713
    %v733 = vlaneseq
    %v734 = vshrl.u32 %v733, 7
    %v735 = vsub.s32 0, %v734
    %v736 = vrot.slane %v731, %v735
    %v738 = vpack.i.b16 %v715, %v715
    %v740 = vlaneseq
    %v741 = vshrl.u32 %v740, 7
    %v742 = vsub.s32 0, %v741
    %v743 = vrot.slane %v738, %v742
    %v744 = vadd.bf16 %v693, %v722
    %v745 = vadd.bf16 %v694, %v729
    %v746 = vadd.bf16 %v695, %v736
    %v747 = vadd.bf16 %v696, %v743
    %v748 = vmul.bf16 %v744, 1045249613
    %v749 = vmul.bf16 %v745, 1045249613
    %v750 = vmul.bf16 %v746, 1045249613
    %v751 = vmul.bf16 %v747, 1045249613
    %v752 = vmax.bf16 %v744, %v748
    %v753 = vmax.bf16 %v745, %v749
    %v754 = vmax.bf16 %v746, %v750
    %v755 = vmax.bf16 %v747, %v751
    %v756 = vld [vmem:[#allocation4] sm:$0xff]
    %v757 = vld [vmem:[#allocation4 + $0x8] sm:$0xff]
    %v758 = vld [vmem:[#allocation4 + $0x10] sm:$0xff]
    %v759 = vld [vmem:[#allocation4 + $0x18] sm:$0xff]
    %v760 = vld [vmem:[#allocation4 + $0x20] sm:$0xff]
    %v761 = vld [vmem:[#allocation4 + $0x28] sm:$0xff]
    %v762 = vld [vmem:[#allocation4 + $0x30] sm:$0xff]
    %v763 = vld [vmem:[#allocation4 + $0x38] sm:$0xff]
    %v764 = vld [vmem:[#allocation4 + $0x40] sm:$0xff]
    %v765 = vld [vmem:[#allocation4 + $0x48] sm:$0xff]
    %v766 = vld [vmem:[#allocation4 + $0x50] sm:$0xff]
    %v767 = vld [vmem:[#allocation4 + $0x58] sm:$0xff]
    %v768 = vld [vmem:[#allocation4 + $0x60] sm:$0xff]
    %v769 = vld [vmem:[#allocation4 + $0x68] sm:$0xff]
    %v770 = vld [vmem:[#allocation4 + $0x70] sm:$0xff]
    %v771 = vld [vmem:[#allocation4 + $0x78] sm:$0xff]
    %v772 = vld [vmem:[#allocation4 + $0x80] sm:$0xff]
    %v773 = vld [vmem:[#allocation4 + $0x88] sm:$0xff]
    %v774 = vld [vmem:[#allocation4 + $0x90] sm:$0xff]
    %v775 = vld [vmem:[#allocation4 + $0x98] sm:$0xff]
    %v776 = vld [vmem:[#allocation4 + $0xa0] sm:$0xff]
    %v777 = vld [vmem:[#allocation4 + $0xa8] sm:$0xff]
    %v778 = vld [vmem:[#allocation4 + $0xb0] sm:$0xff]
    %v779 = vld [vmem:[#allocation4 + $0xb8] sm:$0xff]
    %v780 = vld [vmem:[#allocation4 + $0xc0] sm:$0xff]
    %v781 = vld [vmem:[#allocation4 + $0xc8] sm:$0xff]
    %v782 = vld [vmem:[#allocation4 + $0xd0] sm:$0xff]
    %v783 = vld [vmem:[#allocation4 + $0xd8] sm:$0xff]
    %v784 = vld [vmem:[#allocation4 + $0xe0] sm:$0xff]
    %v785 = vld [vmem:[#allocation4 + $0xe8] sm:$0xff]
    %v786 = vld [vmem:[#allocation4 + $0xf0] sm:$0xff]
    %v787 = vld [vmem:[#allocation4 + $0xf8] sm:$0xff]
    %v788 = vld [vmem:[#allocation4 + $0x100] sm:$0xff]
    %v789 = vld [vmem:[#allocation4 + $0x108] sm:$0xff]
    %v790 = vld [vmem:[#allocation4 + $0x110] sm:$0xff]
    %v791 = vld [vmem:[#allocation4 + $0x118] sm:$0xff]
    %v792 = vld [vmem:[#allocation4 + $0x120] sm:$0xff]
    %v793 = vld [vmem:[#allocation4 + $0x128] sm:$0xff]
    %v794 = vld [vmem:[#allocation4 + $0x130] sm:$0xff]
    %v795 = vld [vmem:[#allocation4 + $0x138] sm:$0xff]
    %v796 = vld [vmem:[#allocation4 + $0x140] sm:$0xff]
    %v797 = vld [vmem:[#allocation4 + $0x148] sm:$0xff]
    %v798 = vld [vmem:[#allocation4 + $0x150] sm:$0xff]
    %v799 = vld [vmem:[#allocation4 + $0x158] sm:$0xff]
    %v800 = vld [vmem:[#allocation4 + $0x160] sm:$0xff]
    %v801 = vld [vmem:[#allocation4 + $0x168] sm:$0xff]
    %v802 = vld [vmem:[#allocation4 + $0x170] sm:$0xff]
    %v803 = vld [vmem:[#allocation4 + $0x178] sm:$0xff]
    %v804 = vld [vmem:[#allocation4 + $0x180] sm:$0xff]
    %v805 = vld [vmem:[#allocation4 + $0x188] sm:$0xff]
    %v806 = vld [vmem:[#allocation4 + $0x190] sm:$0xff]
    %v807 = vld [vmem:[#allocation4 + $0x198] sm:$0xff]
    %v808 = vld [vmem:[#allocation4 + $0x1a0] sm:$0xff]
    %v809 = vld [vmem:[#allocation4 + $0x1a8] sm:$0xff]
    %v810 = vld [vmem:[#allocation4 + $0x1b0] sm:$0xff]
    %v811 = vld [vmem:[#allocation4 + $0x1b8] sm:$0xff]
    %v812 = vld [vmem:[#allocation4 + $0x1c0] sm:$0xff]
    %v813 = vld [vmem:[#allocation4 + $0x1c8] sm:$0xff]
    %v814 = vld [vmem:[#allocation4 + $0x1d0] sm:$0xff]
    %v815 = vld [vmem:[#allocation4 + $0x1d8] sm:$0xff]
    %v816 = vld [vmem:[#allocation4 + $0x1e0] sm:$0xff]
    %v817 = vld [vmem:[#allocation4 + $0x1e8] sm:$0xff]
    %v818 = vld [vmem:[#allocation4 + $0x1f0] sm:$0xff]
    %v819 = vld [vmem:[#allocation4 + $0x1f8] sm:$0xff]
    %v820 = vld [vmem:[#allocation4 + $0x200] sm:$0xff]
    %v821 = vld [vmem:[#allocation4 + $0x208] sm:$0xff]
    %v822 = vld [vmem:[#allocation4 + $0x210] sm:$0xff]
    %v823 = vld [vmem:[#allocation4 + $0x218] sm:$0xff]
    %v824 = vld [vmem:[#allocation4 + $0x220] sm:$0xff]
    %v825 = vld [vmem:[#allocation4 + $0x228] sm:$0xff]
    %v826 = vld [vmem:[#allocation4 + $0x230] sm:$0xff]
    %v827 = vld [vmem:[#allocation4 + $0x238] sm:$0xff]
    %v828 = vld [vmem:[#allocation4 + $0x240] sm:$0xff]
    %v829 = vld [vmem:[#allocation4 + $0x248] sm:$0xff]
    %v830 = vld [vmem:[#allocation4 + $0x250] sm:$0xff]
    %v831 = vld [vmem:[#allocation4 + $0x258] sm:$0xff]
    %v832 = vld [vmem:[#allocation4 + $0x260] sm:$0xff]
    %v833 = vld [vmem:[#allocation4 + $0x268] sm:$0xff]
    %v834 = vld [vmem:[#allocation4 + $0x270] sm:$0xff]
    %v835 = vld [vmem:[#allocation4 + $0x278] sm:$0xff]
    %v836 = vld [vmem:[#allocation4 + $0x280] sm:$0xff]
    %v837 = vld [vmem:[#allocation4 + $0x288] sm:$0xff]
    %v838 = vld [vmem:[#allocation4 + $0x290] sm:$0xff]
    %v839 = vld [vmem:[#allocation4 + $0x298] sm:$0xff]
    %v840 = vld [vmem:[#allocation4 + $0x2a0] sm:$0xff]
    %v841 = vld [vmem:[#allocation4 + $0x2a8] sm:$0xff]
    %v842 = vld [vmem:[#allocation4 + $0x2b0] sm:$0xff]
    %v843 = vld [vmem:[#allocation4 + $0x2b8] sm:$0xff]
    %v844 = vld [vmem:[#allocation4 + $0x2c0] sm:$0xff]
    %v845 = vld [vmem:[#allocation4 + $0x2c8] sm:$0xff]
    %v846 = vld [vmem:[#allocation4 + $0x2d0] sm:$0xff]
    %v847 = vld [vmem:[#allocation4 + $0x2d8] sm:$0xff]
    %v848 = vld [vmem:[#allocation4 + $0x2e0] sm:$0xff]
    %v849 = vld [vmem:[#allocation4 + $0x2e8] sm:$0xff]
    %v850 = vld [vmem:[#allocation4 + $0x2f0] sm:$0xff]
    %v851 = vld [vmem:[#allocation4 + $0x2f8] sm:$0xff]
    %v852 = vld [vmem:[#allocation4 + $0x300] sm:$0xff]
    %v853 = vld [vmem:[#allocation4 + $0x308] sm:$0xff]
    %v854 = vld [vmem:[#allocation4 + $0x310] sm:$0xff]
    %v855 = vld [vmem:[#allocation4 + $0x318] sm:$0xff]
    %v856 = vld [vmem:[#allocation4 + $0x320] sm:$0xff]
    %v857 = vld [vmem:[#allocation4 + $0x328] sm:$0xff]
    %v858 = vld [vmem:[#allocation4 + $0x330] sm:$0xff]
    %v859 = vld [vmem:[#allocation4 + $0x338] sm:$0xff]
    %v860 = vld [vmem:[#allocation4 + $0x340] sm:$0xff]
    %v861 = vld [vmem:[#allocation4 + $0x348] sm:$0xff]
    %v862 = vld [vmem:[#allocation4 + $0x350] sm:$0xff]
    %v863 = vld [vmem:[#allocation4 + $0x358] sm:$0xff]
    %v864 = vld [vmem:[#allocation4 + $0x360] sm:$0xff]
    %v865 = vld [vmem:[#allocation4 + $0x368] sm:$0xff]
    %v866 = vld [vmem:[#allocation4 + $0x370] sm:$0xff]
    %v867 = vld [vmem:[#allocation4 + $0x378] sm:$0xff]
    %v868 = vld [vmem:[#allocation4 + $0x380] sm:$0xff]
    %v869 = vld [vmem:[#allocation4 + $0x388] sm:$0xff]
    %v870 = vld [vmem:[#allocation4 + $0x390] sm:$0xff]
    %v871 = vld [vmem:[#allocation4 + $0x398] sm:$0xff]
    %v872 = vld [vmem:[#allocation4 + $0x3a0] sm:$0xff]
    %v873 = vld [vmem:[#allocation4 + $0x3a8] sm:$0xff]
    %v874 = vld [vmem:[#allocation4 + $0x3b0] sm:$0xff]
    %v875 = vld [vmem:[#allocation4 + $0x3b8] sm:$0xff]
    %v876 = vld [vmem:[#allocation4 + $0x3c0] sm:$0xff]
    %v877 = vld [vmem:[#allocation4 + $0x3c8] sm:$0xff]
    %v878 = vld [vmem:[#allocation4 + $0x3d0] sm:$0xff]
    %v879 = vld [vmem:[#allocation4 + $0x3d8] sm:$0xff]
    %v880 = vld [vmem:[#allocation4 + $0x3e0] sm:$0xff]
    %v881 = vld [vmem:[#allocation4 + $0x3e8] sm:$0xff]
    %v882 = vld [vmem:[#allocation4 + $0x3f0] sm:$0xff]
    %v883 = vld [vmem:[#allocation4 + $0x3f8] sm:$0xff]
    %v1012 = vunpack.c.l.b16 %v756
    %v1013 = vunpack.c.h.b16 %v756
    %v1014 = vunpack.c.l.b16 %v757
    %v1015 = vunpack.c.h.b16 %v757
    %v1016 = vunpack.c.l.b16 %v758
    %v1017 = vunpack.c.h.b16 %v758
    %v1018 = vunpack.c.l.b16 %v759
    %v1019 = vunpack.c.h.b16 %v759
    %v1020 = vunpack.c.l.b16 %v760
    %v1021 = vunpack.c.h.b16 %v760
    %v1022 = vunpack.c.l.b16 %v761
    %v1023 = vunpack.c.h.b16 %v761
    %v1024 = vunpack.c.l.b16 %v762
    %v1025 = vunpack.c.h.b16 %v762
    %v1026 = vunpack.c.l.b16 %v763
    %v1027 = vunpack.c.h.b16 %v763
    %v1028 = vunpack.c.l.b16 %v764
    %v1029 = vunpack.c.h.b16 %v764
    %v1030 = vunpack.c.l.b16 %v765
    %v1031 = vunpack.c.h.b16 %v765
    %v1032 = vunpack.c.l.b16 %v766
    %v1033 = vunpack.c.h.b16 %v766
    %v1034 = vunpack.c.l.b16 %v767
    %v1035 = vunpack.c.h.b16 %v767
    %v1036 = vunpack.c.l.b16 %v768
    %v1037 = vunpack.c.h.b16 %v768
    %v1038 = vunpack.c.l.b16 %v769
    %v1039 = vunpack.c.h.b16 %v769
    %v1040 = vunpack.c.l.b16 %v770
    %v1041 = vunpack.c.h.b16 %v770
    %v1042 = vunpack.c.l.b16 %v771
    %v1043 = vunpack.c.h.b16 %v771
    %v1044 = vunpack.c.l.b16 %v772
    %v1045 = vunpack.c.h.b16 %v772
    %v1046 = vunpack.c.l.b16 %v773
    %v1047 = vunpack.c.h.b16 %v773
    %v1048 = vunpack.c.l.b16 %v774
    %v1049 = vunpack.c.h.b16 %v774
    %v1050 = vunpack.c.l.b16 %v775
    %v1051 = vunpack.c.h.b16 %v775
    %v1052 = vunpack.c.l.b16 %v776
    %v1053 = vunpack.c.h.b16 %v776
    %v1054 = vunpack.c.l.b16 %v777
    %v1055 = vunpack.c.h.b16 %v777
    %v1056 = vunpack.c.l.b16 %v778
    %v1057 = vunpack.c.h.b16 %v778
    %v1058 = vunpack.c.l.b16 %v779
    %v1059 = vunpack.c.h.b16 %v779
    %v1060 = vunpack.c.l.b16 %v780
    %v1061 = vunpack.c.h.b16 %v780
    %v1062 = vunpack.c.l.b16 %v781
    %v1063 = vunpack.c.h.b16 %v781
    %v1064 = vunpack.c.l.b16 %v782
    %v1065 = vunpack.c.h.b16 %v782
    %v1066 = vunpack.c.l.b16 %v783
    %v1067 = vunpack.c.h.b16 %v783
    %v1068 = vunpack.c.l.b16 %v784
    %v1069 = vunpack.c.h.b16 %v784
    %v1070 = vunpack.c.l.b16 %v785
    %v1071 = vunpack.c.h.b16 %v785
    %v1072 = vunpack.c.l.b16 %v786
    %v1073 = vunpack.c.h.b16 %v786
    %v1074 = vunpack.c.l.b16 %v787
    %v1075 = vunpack.c.h.b16 %v787
    %v1076 = vunpack.c.l.b16 %v788
    %v1077 = vunpack.c.h.b16 %v788
    %v1078 = vunpack.c.l.b16 %v789
    %v1079 = vunpack.c.h.b16 %v789
    %v1080 = vunpack.c.l.b16 %v790
    %v1081 = vunpack.c.h.b16 %v790
    %v1082 = vunpack.c.l.b16 %v791
    %v1083 = vunpack.c.h.b16 %v791
    %v1084 = vunpack.c.l.b16 %v792
    %v1085 = vunpack.c.h.b16 %v792
    %v1086 = vunpack.c.l.b16 %v793
    %v1087 = vunpack.c.h.b16 %v793
    %v1088 = vunpack.c.l.b16 %v794
    %v1089 = vunpack.c.h.b16 %v794
    %v1090 = vunpack.c.l.b16 %v795
    %v1091 = vunpack.c.h.b16 %v795
    %v1092 = vunpack.c.l.b16 %v796
    %v1093 = vunpack.c.h.b16 %v796
    %v1094 = vunpack.c.l.b16 %v797
    %v1095 = vunpack.c.h.b16 %v797
    %v1096 = vunpack.c.l.b16 %v798
    %v1097 = vunpack.c.h.b16 %v798
    %v1098 = vunpack.c.l.b16 %v799
    %v1099 = vunpack.c.h.b16 %v799
    %v1100 = vunpack.c.l.b16 %v800
    %v1101 = vunpack.c.h.b16 %v800
    %v1102 = vunpack.c.l.b16 %v801
    %v1103 = vunpack.c.h.b16 %v801
    %v1104 = vunpack.c.l.b16 %v802
    %v1105 = vunpack.c.h.b16 %v802
    %v1106 = vunpack.c.l.b16 %v803
    %v1107 = vunpack.c.h.b16 %v803
    %v1108 = vunpack.c.l.b16 %v804
    %v1109 = vunpack.c.h.b16 %v804
    %v1110 = vunpack.c.l.b16 %v805
    %v1111 = vunpack.c.h.b16 %v805
    %v1112 = vunpack.c.l.b16 %v806
    %v1113 = vunpack.c.h.b16 %v806
    %v1114 = vunpack.c.l.b16 %v807
    %v1115 = vunpack.c.h.b16 %v807
    %v1116 = vunpack.c.l.b16 %v808
    %v1117 = vunpack.c.h.b16 %v808
    %v1118 = vunpack.c.l.b16 %v809
    %v1119 = vunpack.c.h.b16 %v809
    %v1120 = vunpack.c.l.b16 %v810
    %v1121 = vunpack.c.h.b16 %v810
    %v1122 = vunpack.c.l.b16 %v811
    %v1123 = vunpack.c.h.b16 %v811
    %v1124 = vunpack.c.l.b16 %v812
    %v1125 = vunpack.c.h.b16 %v812
    %v1126 = vunpack.c.l.b16 %v813
    %v1127 = vunpack.c.h.b16 %v813
    %v1128 = vunpack.c.l.b16 %v814
    %v1129 = vunpack.c.h.b16 %v814
    %v1130 = vunpack.c.l.b16 %v815
    %v1131 = vunpack.c.h.b16 %v815
    %v1132 = vunpack.c.l.b16 %v816
    %v1133 = vunpack.c.h.b16 %v816
    %v1134 = vunpack.c.l.b16 %v817
    %v1135 = vunpack.c.h.b16 %v817
    %v1136 = vunpack.c.l.b16 %v818
    %v1137 = vunpack.c.h.b16 %v818
    %v1138 = vunpack.c.l.b16 %v819
    %v1139 = vunpack.c.h.b16 %v819
    %v1140 = vunpack.c.l.b16 %v820
    %v1141 = vunpack.c.h.b16 %v820
    %v1142 = vunpack.c.l.b16 %v821
    %v1143 = vunpack.c.h.b16 %v821
    %v1144 = vunpack.c.l.b16 %v822
    %v1145 = vunpack.c.h.b16 %v822
    %v1146 = vunpack.c.l.b16 %v823
    %v1147 = vunpack.c.h.b16 %v823
    %v1148 = vunpack.c.l.b16 %v824
    %v1149 = vunpack.c.h.b16 %v824
    %v1150 = vunpack.c.l.b16 %v825
    %v1151 = vunpack.c.h.b16 %v825
    %v1152 = vunpack.c.l.b16 %v826
    %v1153 = vunpack.c.h.b16 %v826
    %v1154 = vunpack.c.l.b16 %v827
    %v1155 = vunpack.c.h.b16 %v827
    %v1156 = vunpack.c.l.b16 %v828
    %v1157 = vunpack.c.h.b16 %v828
    %v1158 = vunpack.c.l.b16 %v829
    %v1159 = vunpack.c.h.b16 %v829
    %v1160 = vunpack.c.l.b16 %v830
    %v1161 = vunpack.c.h.b16 %v830
    %v1162 = vunpack.c.l.b16 %v831
    %v1163 = vunpack.c.h.b16 %v831
    %v1164 = vunpack.c.l.b16 %v832
    %v1165 = vunpack.c.h.b16 %v832
    %v1166 = vunpack.c.l.b16 %v833
    %v1167 = vunpack.c.h.b16 %v833
    %v1168 = vunpack.c.l.b16 %v834
    %v1169 = vunpack.c.h.b16 %v834
    %v1170 = vunpack.c.l.b16 %v835
    %v1171 = vunpack.c.h.b16 %v835
    %v1172 = vunpack.c.l.b16 %v836
    %v1173 = vunpack.c.h.b16 %v836
    %v1174 = vunpack.c.l.b16 %v837
    %v1175 = vunpack.c.h.b16 %v837
    %v1176 = vunpack.c.l.b16 %v838
    %v1177 = vunpack.c.h.b16 %v838
    %v1178 = vunpack.c.l.b16 %v839
    %v1179 = vunpack.c.h.b16 %v839
    %v1180 = vunpack.c.l.b16 %v840
    %v1181 = vunpack.c.h.b16 %v840
    %v1182 = vunpack.c.l.b16 %v841
    %v1183 = vunpack.c.h.b16 %v841
    %v1184 = vunpack.c.l.b16 %v842
    %v1185 = vunpack.c.h.b16 %v842
    %v1186 = vunpack.c.l.b16 %v843
    %v1187 = vunpack.c.h.b16 %v843
    %v1188 = vunpack.c.l.b16 %v844
    %v1189 = vunpack.c.h.b16 %v844
    %v1190 = vunpack.c.l.b16 %v845
    %v1191 = vunpack.c.h.b16 %v845
    %v1192 = vunpack.c.l.b16 %v846
    %v1193 = vunpack.c.h.b16 %v846
    %v1194 = vunpack.c.l.b16 %v847
    %v1195 = vunpack.c.h.b16 %v847
    %v1196 = vunpack.c.l.b16 %v848
    %v1197 = vunpack.c.h.b16 %v848
    %v1198 = vunpack.c.l.b16 %v849
    %v1199 = vunpack.c.h.b16 %v849
    %v1200 = vunpack.c.l.b16 %v850
    %v1201 = vunpack.c.h.b16 %v850
    %v1202 = vunpack.c.l.b16 %v851
    %v1203 = vunpack.c.h.b16 %v851
    %v1204 = vunpack.c.l.b16 %v852
    %v1205 = vunpack.c.h.b16 %v852
    %v1206 = vunpack.c.l.b16 %v853
    %v1207 = vunpack.c.h.b16 %v853
    %v1208 = vunpack.c.l.b16 %v854
    %v1209 = vunpack.c.h.b16 %v854
    %v1210 = vunpack.c.l.b16 %v855
    %v1211 = vunpack.c.h.b16 %v855
    %v1212 = vunpack.c.l.b16 %v856
    %v1213 = vunpack.c.h.b16 %v856
    %v1214 = vunpack.c.l.b16 %v857
    %v1215 = vunpack.c.h.b16 %v857
    %v1216 = vunpack.c.l.b16 %v858
    %v1217 = vunpack.c.h.b16 %v858
    %v1218 = vunpack.c.l.b16 %v859
    %v1219 = vunpack.c.h.b16 %v859
    %v1220 = vunpack.c.l.b16 %v860
    %v1221 = vunpack.c.h.b16 %v860
    %v1222 = vunpack.c.l.b16 %v861
    %v1223 = vunpack.c.h.b16 %v861
    %v1224 = vunpack.c.l.b16 %v862
    %v1225 = vunpack.c.h.b16 %v862
    %v1226 = vunpack.c.l.b16 %v863
    %v1227 = vunpack.c.h.b16 %v863
    %v1228 = vunpack.c.l.b16 %v864
    %v1229 = vunpack.c.h.b16 %v864
    %v1230 = vunpack.c.l.b16 %v865
    %v1231 = vunpack.c.h.b16 %v865
    %v1232 = vunpack.c.l.b16 %v866
    %v1233 = vunpack.c.h.b16 %v866
    %v1234 = vunpack.c.l.b16 %v867
    %v1235 = vunpack.c.h.b16 %v867
    %v1236 = vunpack.c.l.b16 %v868
    %v1237 = vunpack.c.h.b16 %v868
    %v1238 = vunpack.c.l.b16 %v869
    %v1239 = vunpack.c.h.b16 %v869
    %v1240 = vunpack.c.l.b16 %v870
    %v1241 = vunpack.c.h.b16 %v870
    %v1242 = vunpack.c.l.b16 %v871
    %v1243 = vunpack.c.h.b16 %v871
    %v1244 = vunpack.c.l.b16 %v872
    %v1245 = vunpack.c.h.b16 %v872
    %v1246 = vunpack.c.l.b16 %v873
    %v1247 = vunpack.c.h.b16 %v873
    %v1248 = vunpack.c.l.b16 %v874
    %v1249 = vunpack.c.h.b16 %v874
    %v1250 = vunpack.c.l.b16 %v875
    %v1251 = vunpack.c.h.b16 %v875
    %v1252 = vunpack.c.l.b16 %v876
    %v1253 = vunpack.c.h.b16 %v876
    %v1254 = vunpack.c.l.b16 %v877
    %v1255 = vunpack.c.h.b16 %v877
    %v1256 = vunpack.c.l.b16 %v878
    %v1257 = vunpack.c.h.b16 %v878
    %v1258 = vunpack.c.l.b16 %v879
    %v1259 = vunpack.c.h.b16 %v879
    %v1260 = vunpack.c.l.b16 %v880
    %v1261 = vunpack.c.h.b16 %v880
    %v1262 = vunpack.c.l.b16 %v881
    %v1263 = vunpack.c.h.b16 %v881
    %v1264 = vunpack.c.l.b16 %v882
    %v1265 = vunpack.c.h.b16 %v882
    %v1266 = vunpack.c.l.b16 %v883
    %v1267 = vunpack.c.h.b16 %v883
    %v1268 = vpack.c.b16 %v1016, %v1012
    %v1269 = vpack.c.b16 %v1017, %v1013
    %v1270 = vpack.c.b16 %v1018, %v1014
    %v1271 = vpack.c.b16 %v1019, %v1015
    %v1272 = vpack.c.b16 %v1024, %v1020
    %v1273 = vpack.c.b16 %v1025, %v1021
    %v1274 = vpack.c.b16 %v1026, %v1022
    %v1275 = vpack.c.b16 %v1027, %v1023
    %v1276 = vpack.c.b16 %v1032, %v1028
    %v1277 = vpack.c.b16 %v1033, %v1029
    %v1278 = vpack.c.b16 %v1034, %v1030
    %v1279 = vpack.c.b16 %v1035, %v1031
    %v1280 = vpack.c.b16 %v1040, %v1036
    %v1281 = vpack.c.b16 %v1041, %v1037
    %v1282 = vpack.c.b16 %v1042, %v1038
    %v1283 = vpack.c.b16 %v1043, %v1039
    %v1284 = vpack.c.b16 %v1048, %v1044
    %v1285 = vpack.c.b16 %v1049, %v1045
    %v1286 = vpack.c.b16 %v1050, %v1046
    %v1287 = vpack.c.b16 %v1051, %v1047
    %v1288 = vpack.c.b16 %v1056, %v1052
    %v1289 = vpack.c.b16 %v1057, %v1053
    %v1290 = vpack.c.b16 %v1058, %v1054
    %v1291 = vpack.c.b16 %v1059, %v1055
    %v1292 = vpack.c.b16 %v1064, %v1060
    %v1293 = vpack.c.b16 %v1065, %v1061
    %v1294 = vpack.c.b16 %v1066, %v1062
    %v1295 = vpack.c.b16 %v1067, %v1063
    %v1296 = vpack.c.b16 %v1072, %v1068
    %v1297 = vpack.c.b16 %v1073, %v1069
    %v1298 = vpack.c.b16 %v1074, %v1070
    %v1299 = vpack.c.b16 %v1075, %v1071
    %v1300 = vpack.c.b16 %v1080, %v1076
    %v1301 = vpack.c.b16 %v1081, %v1077
    %v1302 = vpack.c.b16 %v1082, %v1078
    %v1303 = vpack.c.b16 %v1083, %v1079
    %v1304 = vpack.c.b16 %v1088, %v1084
    %v1305 = vpack.c.b16 %v1089, %v1085
    %v1306 = vpack.c.b16 %v1090, %v1086
    %v1307 = vpack.c.b16 %v1091, %v1087
    %v1308 = vpack.c.b16 %v1096, %v1092
    %v1309 = vpack.c.b16 %v1097, %v1093
    %v1310 = vpack.c.b16 %v1098, %v1094
    %v1311 = vpack.c.b16 %v1099, %v1095
    %v1312 = vpack.c.b16 %v1104, %v1100
    %v1313 = vpack.c.b16 %v1105, %v1101
    %v1314 = vpack.c.b16 %v1106, %v1102
    %v1315 = vpack.c.b16 %v1107, %v1103
    %v1316 = vpack.c.b16 %v1112, %v1108
    %v1317 = vpack.c.b16 %v1113, %v1109
    %v1318 = vpack.c.b16 %v1114, %v1110
    %v1319 = vpack.c.b16 %v1115, %v1111
    %v1320 = vpack.c.b16 %v1120, %v1116
    %v1321 = vpack.c.b16 %v1121, %v1117
    %v1322 = vpack.c.b16 %v1122, %v1118
    %v1323 = vpack.c.b16 %v1123, %v1119
    %v1324 = vpack.c.b16 %v1128, %v1124
    %v1325 = vpack.c.b16 %v1129, %v1125
    %v1326 = vpack.c.b16 %v1130, %v1126
    %v1327 = vpack.c.b16 %v1131, %v1127
    %v1328 = vpack.c.b16 %v1136, %v1132
    %v1329 = vpack.c.b16 %v1137, %v1133
    %v1330 = vpack.c.b16 %v1138, %v1134
    %v1331 = vpack.c.b16 %v1139, %v1135
    %v1332 = vpack.c.b16 %v1144, %v1140
    %v1333 = vpack.c.b16 %v1145, %v1141
    %v1334 = vpack.c.b16 %v1146, %v1142
    %v1335 = vpack.c.b16 %v1147, %v1143
    %v1336 = vpack.c.b16 %v1152, %v1148
    %v1337 = vpack.c.b16 %v1153, %v1149
    %v1338 = vpack.c.b16 %v1154, %v1150
    %v1339 = vpack.c.b16 %v1155, %v1151
    %v1340 = vpack.c.b16 %v1160, %v1156
    %v1341 = vpack.c.b16 %v1161, %v1157
    %v1342 = vpack.c.b16 %v1162, %v1158
    %v1343 = vpack.c.b16 %v1163, %v1159
    %v1344 = vpack.c.b16 %v1168, %v1164
    %v1345 = vpack.c.b16 %v1169, %v1165
    %v1346 = vpack.c.b16 %v1170, %v1166
    %v1347 = vpack.c.b16 %v1171, %v1167
    %v1348 = vpack.c.b16 %v1176, %v1172
    %v1349 = vpack.c.b16 %v1177, %v1173
    %v1350 = vpack.c.b16 %v1178, %v1174
    %v1351 = vpack.c.b16 %v1179, %v1175
    %v1352 = vpack.c.b16 %v1184, %v1180
    %v1353 = vpack.c.b16 %v1185, %v1181
    %v1354 = vpack.c.b16 %v1186, %v1182
    %v1355 = vpack.c.b16 %v1187, %v1183
    %v1356 = vpack.c.b16 %v1192, %v1188
    %v1357 = vpack.c.b16 %v1193, %v1189
    %v1358 = vpack.c.b16 %v1194, %v1190
    %v1359 = vpack.c.b16 %v1195, %v1191
    %v1360 = vpack.c.b16 %v1200, %v1196
    %v1361 = vpack.c.b16 %v1201, %v1197
    %v1362 = vpack.c.b16 %v1202, %v1198
    %v1363 = vpack.c.b16 %v1203, %v1199
    %v1364 = vpack.c.b16 %v1208, %v1204
    %v1365 = vpack.c.b16 %v1209, %v1205
    %v1366 = vpack.c.b16 %v1210, %v1206
    %v1367 = vpack.c.b16 %v1211, %v1207
    %v1368 = vpack.c.b16 %v1216, %v1212
    %v1369 = vpack.c.b16 %v1217, %v1213
    %v1370 = vpack.c.b16 %v1218, %v1214
    %v1371 = vpack.c.b16 %v1219, %v1215
    %v1372 = vpack.c.b16 %v1224, %v1220
    %v1373 = vpack.c.b16 %v1225, %v1221
    %v1374 = vpack.c.b16 %v1226, %v1222
    %v1375 = vpack.c.b16 %v1227, %v1223
    %v1376 = vpack.c.b16 %v1232, %v1228
    %v1377 = vpack.c.b16 %v1233, %v1229
    %v1378 = vpack.c.b16 %v1234, %v1230
    %v1379 = vpack.c.b16 %v1235, %v1231
    %v1380 = vpack.c.b16 %v1240, %v1236
    %v1381 = vpack.c.b16 %v1241, %v1237
    %v1382 = vpack.c.b16 %v1242, %v1238
    %v1383 = vpack.c.b16 %v1243, %v1239
    %v1384 = vpack.c.b16 %v1248, %v1244
    %v1385 = vpack.c.b16 %v1249, %v1245
    %v1386 = vpack.c.b16 %v1250, %v1246
    %v1387 = vpack.c.b16 %v1251, %v1247
    %v1388 = vpack.c.b16 %v1256, %v1252
    %v1389 = vpack.c.b16 %v1257, %v1253
    %v1390 = vpack.c.b16 %v1258, %v1254
    %v1391 = vpack.c.b16 %v1259, %v1255
    %v1392 = vpack.c.b16 %v1264, %v1260
    %v1393 = vpack.c.b16 %v1265, %v1261
    %v1394 = vpack.c.b16 %v1266, %v1262
    %v1395 = vpack.c.b16 %v1267, %v1263
    %1524 = vmatprep.subr.bf16.mxu0 %v1297
    %1525 = vmatpush1.bf16.msra.mxu0 %v1296
    %1526 = vmatprep.subr.bf16.mxu0 %v1293
    %1527 = vmatpush1.bf16.msra.mxu0 %v1292
    %1528 = vmatprep.subr.bf16.mxu0 %v1289
    %1529 = vmatpush1.bf16.msra.mxu0 %v1288
    %1530 = vmatprep.subr.bf16.mxu0 %v1285
    %1531 = vmatpush1.bf16.msra.mxu0 %v1284
    %1532 = vmatprep.subr.bf16.mxu0 %v1281
    %1533 = vmatpush1.bf16.msra.mxu0 %v1280
    %1534 = vmatprep.subr.bf16.mxu0 %v1277
    %1535 = vmatpush1.bf16.msra.mxu0 %v1276
    %1536 = vmatprep.subr.bf16.mxu0 %v1273
    %1537 = vmatpush1.bf16.msra.mxu0 %v1272
    %1538 = vmatprep.subr.bf16.mxu0 %v1269
    %1539 = vmatpush1.bf16.msra.mxu0 %v1268
    %1540 = vmatprep.subr.bf16.mxu0 %v1329
    %1541 = vmatpush2.bf16.msra.mxu0 %v1328
    %1542 = vmatprep.subr.bf16.mxu0 %v1325
    %1543 = vmatpush2.bf16.msra.mxu0 %v1324
    %1544 = vmatprep.subr.bf16.mxu0 %v1321
    %1545 = vmatpush2.bf16.msra.mxu0 %v1320
    %1546 = vmatprep.subr.bf16.mxu0 %v1317
    %1547 = vmatpush2.bf16.msra.mxu0 %v1316
    %1548 = vmatprep.subr.bf16.mxu0 %v1313
    %1549 = vmatpush2.bf16.msra.mxu0 %v1312
    %1550 = vmatprep.subr.bf16.mxu0 %v1309
    %1551 = vmatpush2.bf16.msra.mxu0 %v1308
    %1552 = vmatprep.subr.bf16.mxu0 %v1305
    %1553 = vmatpush2.bf16.msra.mxu0 %v1304
    %1554 = vmatprep.subr.bf16.mxu0 %v1301
    %1555 = vmatpush2.bf16.msra.mxu0 %v1300
    %1556 = vmatprep.mubr.bf16.mxu0 %v753
    %1557 = vmatmul.mubr.bf16.gmra.mxu0 %v752
    %v1558 = vpop.f32.mrf.mxu0
    %v1559 = vadd.f32 0.0, %v1558
    %v1560 = vpop.f32.mrf.mxu0
    %v1561 = vadd.f32 0.0, %v1560
    %v1562 = vpop.f32.mrf.mxu0
    %v1563 = vadd.f32 0.0, %v1562
    %v1564 = vpop.f32.mrf.mxu0
    %v1565 = vadd.f32 0.0, %v1564
    %1566 = vdwg.mxu0
    %1567 = vmatprep.subr.bf16.mxu0 %v1361
    %1568 = vmatpush1.bf16.msra.mxu0 %v1360
    %1569 = vmatprep.subr.bf16.mxu0 %v1357
    %1570 = vmatpush1.bf16.msra.mxu0 %v1356
    %1571 = vmatprep.subr.bf16.mxu0 %v1353
    %1572 = vmatpush1.bf16.msra.mxu0 %v1352
    %1573 = vmatprep.subr.bf16.mxu0 %v1349
    %1574 = vmatpush1.bf16.msra.mxu0 %v1348
    %1575 = vmatprep.subr.bf16.mxu0 %v1345
    %1576 = vmatpush1.bf16.msra.mxu0 %v1344
    %1577 = vmatprep.subr.bf16.mxu0 %v1341
    %1578 = vmatpush1.bf16.msra.mxu0 %v1340
    %1579 = vmatprep.subr.bf16.mxu0 %v1337
    %1580 = vmatpush1.bf16.msra.mxu0 %v1336
    %1581 = vmatprep.subr.bf16.mxu0 %v1333
    %1582 = vmatpush1.bf16.msra.mxu0 %v1332
    %1583 = vmatprep.subr.bf16.mxu0 %v1393
    %1584 = vmatpush2.bf16.msra.mxu0 %v1392
    %1585 = vmatprep.subr.bf16.mxu0 %v1389
    %1586 = vmatpush2.bf16.msra.mxu0 %v1388
    %1587 = vmatprep.subr.bf16.mxu0 %v1385
    %1588 = vmatpush2.bf16.msra.mxu0 %v1384
    %1589 = vmatprep.subr.bf16.mxu0 %v1381
    %1590 = vmatpush2.bf16.msra.mxu0 %v1380
    %1591 = vmatprep.subr.bf16.mxu0 %v1377
    %1592 = vmatpush2.bf16.msra.mxu0 %v1376
    %1593 = vmatprep.subr.bf16.mxu0 %v1373
    %1594 = vmatpush2.bf16.msra.mxu0 %v1372
    %1595 = vmatprep.subr.bf16.mxu0 %v1369
    %1596 = vmatpush2.bf16.msra.mxu0 %v1368
    %1597 = vmatprep.subr.bf16.mxu0 %v1365
    %1598 = vmatpush2.bf16.msra.mxu0 %v1364
    %1599 = vmatprep.mubr.bf16.mxu0 %v755
    %1600 = vmatmul.mubr.bf16.gmra.mxu0 %v754
    %v1601 = vpop.f32.mrf.mxu0
    %v1602 = vadd.f32 %v1559, %v1601
    %v1603 = vpop.f32.mrf.mxu0
    %v1604 = vadd.f32 %v1561, %v1603
    %v1605 = vpop.f32.mrf.mxu0
    %v1606 = vadd.f32 %v1563, %v1605
    %v1607 = vpop.f32.mrf.mxu0
    %v1608 = vadd.f32 %v1565, %v1607
    %1609 = vdwg.mxu0
    %1610 = vmatprep.subr.bf16.mxu0 %v1299
    %1611 = vmatpush1.bf16.msra.mxu0 %v1298
    %1612 = vmatprep.subr.bf16.mxu0 %v1295
    %1613 = vmatpush1.bf16.msra.mxu0 %v1294
    %1614 = vmatprep.subr.bf16.mxu0 %v1291
    %1615 = vmatpush1.bf16.msra.mxu0 %v1290
    %1616 = vmatprep.subr.bf16.mxu0 %v1287
    %1617 = vmatpush1.bf16.msra.mxu0 %v1286
    %1618 = vmatprep.subr.bf16.mxu0 %v1283
    %1619 = vmatpush1.bf16.msra.mxu0 %v1282
    %1620 = vmatprep.subr.bf16.mxu0 %v1279
    %1621 = vmatpush1.bf16.msra.mxu0 %v1278
    %1622 = vmatprep.subr.bf16.mxu0 %v1275
    %1623 = vmatpush1.bf16.msra.mxu0 %v1274
    %1624 = vmatprep.subr.bf16.mxu0 %v1271
    %1625 = vmatpush1.bf16.msra.mxu0 %v1270
    %1626 = vmatprep.subr.bf16.mxu0 %v1331
    %1627 = vmatpush2.bf16.msra.mxu0 %v1330
    %1628 = vmatprep.subr.bf16.mxu0 %v1327
    %1629 = vmatpush2.bf16.msra.mxu0 %v1326
    %1630 = vmatprep.subr.bf16.mxu0 %v1323
    %1631 = vmatpush2.bf16.msra.mxu0 %v1322
    %1632 = vmatprep.subr.bf16.mxu0 %v1319
    %1633 = vmatpush2.bf16.msra.mxu0 %v1318
    %1634 = vmatprep.subr.bf16.mxu0 %v1315
    %1635 = vmatpush2.bf16.msra.mxu0 %v1314
    %1636 = vmatprep.subr.bf16.mxu0 %v1311
    %1637 = vmatpush2.bf16.msra.mxu0 %v1310
    %1638 = vmatprep.subr.bf16.mxu0 %v1307
    %1639 = vmatpush2.bf16.msra.mxu0 %v1306
    %1640 = vmatprep.subr.bf16.mxu0 %v1303
    %1641 = vmatpush2.bf16.msra.mxu0 %v1302
    %1642 = vmatprep.mubr.bf16.mxu0 %v753
    %1643 = vmatmul.mubr.bf16.gmra.mxu0 %v752
    %v1644 = vpop.f32.mrf.mxu0
    %v1645 = vadd.f32 0.0, %v1644
    %v1646 = vpop.f32.mrf.mxu0
    %v1647 = vadd.f32 0.0, %v1646
    %v1648 = vpop.f32.mrf.mxu0
    %v1649 = vadd.f32 0.0, %v1648
    %v1650 = vpop.f32.mrf.mxu0
    %v1651 = vadd.f32 0.0, %v1650
    %1652 = vdwg.mxu0
    %1653 = vmatprep.subr.bf16.mxu0 %v1363
    %1654 = vmatpush1.bf16.msra.mxu0 %v1362
    %1655 = vmatprep.subr.bf16.mxu0 %v1359
    %1656 = vmatpush1.bf16.msra.mxu0 %v1358
    %1657 = vmatprep.subr.bf16.mxu0 %v1355
    %1658 = vmatpush1.bf16.msra.mxu0 %v1354
    %1659 = vmatprep.subr.bf16.mxu0 %v1351
    %1660 = vmatpush1.bf16.msra.mxu0 %v1350
    %1661 = vmatprep.subr.bf16.mxu0 %v1347
    %1662 = vmatpush1.bf16.msra.mxu0 %v1346
    %1663 = vmatprep.subr.bf16.mxu0 %v1343
    %1664 = vmatpush1.bf16.msra.mxu0 %v1342
    %1665 = vmatprep.subr.bf16.mxu0 %v1339
    %1666 = vmatpush1.bf16.msra.mxu0 %v1338
    %1667 = vmatprep.subr.bf16.mxu0 %v1335
    %1668 = vmatpush1.bf16.msra.mxu0 %v1334
    %1669 = vmatprep.subr.bf16.mxu0 %v1395
    %1670 = vmatpush2.bf16.msra.mxu0 %v1394
    %1671 = vmatprep.subr.bf16.mxu0 %v1391
    %1672 = vmatpush2.bf16.msra.mxu0 %v1390
    %1673 = vmatprep.subr.bf16.mxu0 %v1387
    %1674 = vmatpush2.bf16.msra.mxu0 %v1386
    %1675 = vmatprep.subr.bf16.mxu0 %v1383
    %1676 = vmatpush2.bf16.msra.mxu0 %v1382
    %1677 = vmatprep.subr.bf16.mxu0 %v1379
    %1678 = vmatpush2.bf16.msra.mxu0 %v1378
    %1679 = vmatprep.subr.bf16.mxu0 %v1375
    %1680 = vmatpush2.bf16.msra.mxu0 %v1374
    %1681 = vmatprep.subr.bf16.mxu0 %v1371
    %1682 = vmatpush2.bf16.msra.mxu0 %v1370
    %1683 = vmatprep.subr.bf16.mxu0 %v1367
    %1684 = vmatpush2.bf16.msra.mxu0 %v1366
    %1685 = vmatprep.mubr.bf16.mxu0 %v755
    %1686 = vmatmul.mubr.bf16.gmra.mxu0 %v754
    %v1687 = vpop.f32.mrf.mxu0
    %v1688 = vadd.f32 %v1645, %v1687
    %v1689 = vpop.f32.mrf.mxu0
    %v1690 = vadd.f32 %v1647, %v1689
    %v1691 = vpop.f32.mrf.mxu0
    %v1692 = vadd.f32 %v1649, %v1691
    %v1693 = vpop.f32.mrf.mxu0
    %v1694 = vadd.f32 %v1651, %v1693
    %1695 = vdwg.mxu0
    %v1696 = vpack.c.bf16 %v1606, %v1602
    %v1697 = vpack.c.bf16 %v1608, %v1604
    %v1698 = vpack.c.bf16 %v1692, %v1688
    %v1699 = vpack.c.bf16 %v1694, %v1690
    %v1700 = vld [vmem:[%s4] sm:$0x55]
    %v1702 = vcombine.high %v1700, %v1700
    %v1704 = vunpack.c.l.s4 1983009808
    %v1705 = vunpack.c.0.s8 %v1704
    %v1706 = vlaneseq
    %v1707 = vshrl.u32 %v1706, 7
    %v1708 = vsub.s32 %v1705, %v1707
    %v1709 = vrot.slane %v1700, %v1708
    %v1711 = vunpack.c.l.s4 1983009808
    %v1712 = vunpack.c.0.s8 %v1711
    %v1713 = vlaneseq
    %v1714 = vshrl.u32 %v1713, 7
    %v1715 = vsub.s32 %v1712, %v1714
    %v1716 = vrot.slane %v1702, %v1715
    %v1717 = vcombine.high %v1709, %v1709
    %v1718 = vcombine.high %v1716, %v1716
    %v1720 = vshrl.u32 %v1709, 16
    %v1721 = vpack.i.b16 %v1720, %v1720
    %v1723 = vlaneseq
    %v1724 = vshrl.u32 %v1723, 7
    %v1725 = vsub.s32 0, %v1724
    %v1726 = vrot.slane %v1721, %v1725
    %v1728 = vshrl.u32 %v1717, 16
    %v1729 = vpack.i.b16 %v1728, %v1728
    %v1731 = vlaneseq
    %v1732 = vshrl.u32 %v1731, 7
    %v1733 = vsub.s32 0, %v1732
    %v1734 = vrot.slane %v1729, %v1733
    %v1736 = vshrl.u32 %v1716, 16
    %v1737 = vpack.i.b16 %v1736, %v1736
    %v1739 = vlaneseq
    %v1740 = vshrl.u32 %v1739, 7
    %v1741 = vsub.s32 0, %v1740
    %v1742 = vrot.slane %v1737, %v1741
    %v1744 = vshrl.u32 %v1718, 16
    %v1745 = vpack.i.b16 %v1744, %v1744
    %v1747 = vlaneseq
    %v1748 = vshrl.u32 %v1747, 7
    %v1749 = vsub.s32 0, %v1748
    %v1750 = vrot.slane %v1745, %v1749
    %v1751 = vadd.bf16 %v1696, %v1726
    %v1752 = vadd.bf16 %v1697, %v1734
    %v1753 = vadd.bf16 %v1698, %v1742
    %v1754 = vadd.bf16 %v1699, %v1750
    %v1755 = vmul.bf16 %v1751, 1045249613
    %v1756 = vmul.bf16 %v1752, 1045249613
    %v1757 = vmul.bf16 %v1753, 1045249613
    %v1758 = vmul.bf16 %v1754, 1045249613
    %v1759 = vmax.bf16 %v1751, %v1755
    %v1760 = vmax.bf16 %v1752, %v1756
    %v1761 = vmax.bf16 %v1753, %v1757
    %v1762 = vmax.bf16 %v1754, %v1758
    %v1763 = vld [vmem:[#allocation6] sm:$0xff]
    %v1764 = vld [vmem:[#allocation6 + $0x8] sm:$0xff]
    %v1765 = vld [vmem:[#allocation6 + $0x10] sm:$0xff]
    %v1766 = vld [vmem:[#allocation6 + $0x18] sm:$0xff]
    %v1767 = vld [vmem:[#allocation6 + $0x20] sm:$0xff]
    %v1768 = vld [vmem:[#allocation6 + $0x28] sm:$0xff]
    %v1769 = vld [vmem:[#allocation6 + $0x30] sm:$0xff]
    %v1770 = vld [vmem:[#allocation6 + $0x38] sm:$0xff]
    %v1771 = vld [vmem:[#allocation6 + $0x40] sm:$0xff]
    %v1772 = vld [vmem:[#allocation6 + $0x48] sm:$0xff]
    %v1773 = vld [vmem:[#allocation6 + $0x50] sm:$0xff]
    %v1774 = vld [vmem:[#allocation6 + $0x58] sm:$0xff]
    %v1775 = vld [vmem:[#allocation6 + $0x60] sm:$0xff]
    %v1776 = vld [vmem:[#allocation6 + $0x68] sm:$0xff]
    %v1777 = vld [vmem:[#allocation6 + $0x70] sm:$0xff]
    %v1778 = vld [vmem:[#allocation6 + $0x78] sm:$0xff]
    %v1779 = vld [vmem:[#allocation6 + $0x80] sm:$0xff]
    %v1780 = vld [vmem:[#allocation6 + $0x88] sm:$0xff]
    %v1781 = vld [vmem:[#allocation6 + $0x90] sm:$0xff]
    %v1782 = vld [vmem:[#allocation6 + $0x98] sm:$0xff]
    %v1783 = vld [vmem:[#allocation6 + $0xa0] sm:$0xff]
    %v1784 = vld [vmem:[#allocation6 + $0xa8] sm:$0xff]
    %v1785 = vld [vmem:[#allocation6 + $0xb0] sm:$0xff]
    %v1786 = vld [vmem:[#allocation6 + $0xb8] sm:$0xff]
    %v1787 = vld [vmem:[#allocation6 + $0xc0] sm:$0xff]
    %v1788 = vld [vmem:[#allocation6 + $0xc8] sm:$0xff]
    %v1789 = vld [vmem:[#allocation6 + $0xd0] sm:$0xff]
    %v1790 = vld [vmem:[#allocation6 + $0xd8] sm:$0xff]
    %v1791 = vld [vmem:[#allocation6 + $0xe0] sm:$0xff]
    %v1792 = vld [vmem:[#allocation6 + $0xe8] sm:$0xff]
    %v1793 = vld [vmem:[#allocation6 + $0xf0] sm:$0xff]
    %v1794 = vld [vmem:[#allocation6 + $0xf8] sm:$0xff]
    %v1795 = vld [vmem:[#allocation6 + $0x100] sm:$0xff]
    %v1796 = vld [vmem:[#allocation6 + $0x108] sm:$0xff]
    %v1797 = vld [vmem:[#allocation6 + $0x110] sm:$0xff]
    %v1798 = vld [vmem:[#allocation6 + $0x118] sm:$0xff]
    %v1799 = vld [vmem:[#allocation6 + $0x120] sm:$0xff]
    %v1800 = vld [vmem:[#allocation6 + $0x128] sm:$0xff]
    %v1801 = vld [vmem:[#allocation6 + $0x130] sm:$0xff]
    %v1802 = vld [vmem:[#allocation6 + $0x138] sm:$0xff]
    %v1803 = vld [vmem:[#allocation6 + $0x140] sm:$0xff]
    %v1804 = vld [vmem:[#allocation6 + $0x148] sm:$0xff]
    %v1805 = vld [vmem:[#allocation6 + $0x150] sm:$0xff]
    %v1806 = vld [vmem:[#allocation6 + $0x158] sm:$0xff]
    %v1807 = vld [vmem:[#allocation6 + $0x160] sm:$0xff]
    %v1808 = vld [vmem:[#allocation6 + $0x168] sm:$0xff]
    %v1809 = vld [vmem:[#allocation6 + $0x170] sm:$0xff]
    %v1810 = vld [vmem:[#allocation6 + $0x178] sm:$0xff]
    %v1811 = vld [vmem:[#allocation6 + $0x180] sm:$0xff]
    %v1812 = vld [vmem:[#allocation6 + $0x188] sm:$0xff]
    %v1813 = vld [vmem:[#allocation6 + $0x190] sm:$0xff]
    %v1814 = vld [vmem:[#allocation6 + $0x198] sm:$0xff]
    %v1815 = vld [vmem:[#allocation6 + $0x1a0] sm:$0xff]
    %v1816 = vld [vmem:[#allocation6 + $0x1a8] sm:$0xff]
    %v1817 = vld [vmem:[#allocation6 + $0x1b0] sm:$0xff]
    %v1818 = vld [vmem:[#allocation6 + $0x1b8] sm:$0xff]
    %v1819 = vld [vmem:[#allocation6 + $0x1c0] sm:$0xff]
    %v1820 = vld [vmem:[#allocation6 + $0x1c8] sm:$0xff]
    %v1821 = vld [vmem:[#allocation6 + $0x1d0] sm:$0xff]
    %v1822 = vld [vmem:[#allocation6 + $0x1d8] sm:$0xff]
    %v1823 = vld [vmem:[#allocation6 + $0x1e0] sm:$0xff]
    %v1824 = vld [vmem:[#allocation6 + $0x1e8] sm:$0xff]
    %v1825 = vld [vmem:[#allocation6 + $0x1f0] sm:$0xff]
    %v1826 = vld [vmem:[#allocation6 + $0x1f8] sm:$0xff]
    %v1827 = vld [vmem:[#allocation6 + $0x200] sm:$0xff]
    %v1828 = vld [vmem:[#allocation6 + $0x208] sm:$0xff]
    %v1829 = vld [vmem:[#allocation6 + $0x210] sm:$0xff]
    %v1830 = vld [vmem:[#allocation6 + $0x218] sm:$0xff]
    %v1831 = vld [vmem:[#allocation6 + $0x220] sm:$0xff]
    %v1832 = vld [vmem:[#allocation6 + $0x228] sm:$0xff]
    %v1833 = vld [vmem:[#allocation6 + $0x230] sm:$0xff]
    %v1834 = vld [vmem:[#allocation6 + $0x238] sm:$0xff]
    %v1835 = vld [vmem:[#allocation6 + $0x240] sm:$0xff]
    %v1836 = vld [vmem:[#allocation6 + $0x248] sm:$0xff]
    %v1837 = vld [vmem:[#allocation6 + $0x250] sm:$0xff]
    %v1838 = vld [vmem:[#allocation6 + $0x258] sm:$0xff]
    %v1839 = vld [vmem:[#allocation6 + $0x260] sm:$0xff]
    %v1840 = vld [vmem:[#allocation6 + $0x268] sm:$0xff]
    %v1841 = vld [vmem:[#allocation6 + $0x270] sm:$0xff]
    %v1842 = vld [vmem:[#allocation6 + $0x278] sm:$0xff]
    %v1843 = vld [vmem:[#allocation6 + $0x280] sm:$0xff]
    %v1844 = vld [vmem:[#allocation6 + $0x288] sm:$0xff]
    %v1845 = vld [vmem:[#allocation6 + $0x290] sm:$0xff]
    %v1846 = vld [vmem:[#allocation6 + $0x298] sm:$0xff]
    %v1847 = vld [vmem:[#allocation6 + $0x2a0] sm:$0xff]
    %v1848 = vld [vmem:[#allocation6 + $0x2a8] sm:$0xff]
    %v1849 = vld [vmem:[#allocation6 + $0x2b0] sm:$0xff]
    %v1850 = vld [vmem:[#allocation6 + $0x2b8] sm:$0xff]
    %v1851 = vld [vmem:[#allocation6 + $0x2c0] sm:$0xff]
    %v1852 = vld [vmem:[#allocation6 + $0x2c8] sm:$0xff]
    %v1853 = vld [vmem:[#allocation6 + $0x2d0] sm:$0xff]
    %v1854 = vld [vmem:[#allocation6 + $0x2d8] sm:$0xff]
    %v1855 = vld [vmem:[#allocation6 + $0x2e0] sm:$0xff]
    %v1856 = vld [vmem:[#allocation6 + $0x2e8] sm:$0xff]
    %v1857 = vld [vmem:[#allocation6 + $0x2f0] sm:$0xff]
    %v1858 = vld [vmem:[#allocation6 + $0x2f8] sm:$0xff]
    %v1859 = vld [vmem:[#allocation6 + $0x300] sm:$0xff]
    %v1860 = vld [vmem:[#allocation6 + $0x308] sm:$0xff]
    %v1861 = vld [vmem:[#allocation6 + $0x310] sm:$0xff]
    %v1862 = vld [vmem:[#allocation6 + $0x318] sm:$0xff]
    %v1863 = vld [vmem:[#allocation6 + $0x320] sm:$0xff]
    %v1864 = vld [vmem:[#allocation6 + $0x328] sm:$0xff]
    %v1865 = vld [vmem:[#allocation6 + $0x330] sm:$0xff]
    %v1866 = vld [vmem:[#allocation6 + $0x338] sm:$0xff]
    %v1867 = vld [vmem:[#allocation6 + $0x340] sm:$0xff]
    %v1868 = vld [vmem:[#allocation6 + $0x348] sm:$0xff]
    %v1869 = vld [vmem:[#allocation6 + $0x350] sm:$0xff]
    %v1870 = vld [vmem:[#allocation6 + $0x358] sm:$0xff]
    %v1871 = vld [vmem:[#allocation6 + $0x360] sm:$0xff]
    %v1872 = vld [vmem:[#allocation6 + $0x368] sm:$0xff]
    %v1873 = vld [vmem:[#allocation6 + $0x370] sm:$0xff]
    %v1874 = vld [vmem:[#allocation6 + $0x378] sm:$0xff]
    %v1875 = vld [vmem:[#allocation6 + $0x380] sm:$0xff]
    %v1876 = vld [vmem:[#allocation6 + $0x388] sm:$0xff]
    %v1877 = vld [vmem:[#allocation6 + $0x390] sm:$0xff]
    %v1878 = vld [vmem:[#allocation6 + $0x398] sm:$0xff]
    %v1879 = vld [vmem:[#allocation6 + $0x3a0] sm:$0xff]
    %v1880 = vld [vmem:[#allocation6 + $0x3a8] sm:$0xff]
    %v1881 = vld [vmem:[#allocation6 + $0x3b0] sm:$0xff]
    %v1882 = vld [vmem:[#allocation6 + $0x3b8] sm:$0xff]
    %v1883 = vld [vmem:[#allocation6 + $0x3c0] sm:$0xff]
    %v1884 = vld [vmem:[#allocation6 + $0x3c8] sm:$0xff]
    %v1885 = vld [vmem:[#allocation6 + $0x3d0] sm:$0xff]
    %v1886 = vld [vmem:[#allocation6 + $0x3d8] sm:$0xff]
    %v1887 = vld [vmem:[#allocation6 + $0x3e0] sm:$0xff]
    %v1888 = vld [vmem:[#allocation6 + $0x3e8] sm:$0xff]
    %v1889 = vld [vmem:[#allocation6 + $0x3f0] sm:$0xff]
    %v1890 = vld [vmem:[#allocation6 + $0x3f8] sm:$0xff]
    %v2019 = vunpack.c.l.b16 %v1763
    %v2020 = vunpack.c.h.b16 %v1763
    %v2021 = vunpack.c.l.b16 %v1764
    %v2022 = vunpack.c.h.b16 %v1764
    %v2023 = vunpack.c.l.b16 %v1765
    %v2024 = vunpack.c.h.b16 %v1765
    %v2025 = vunpack.c.l.b16 %v1766
    %v2026 = vunpack.c.h.b16 %v1766
    %v2027 = vunpack.c.l.b16 %v1767
    %v2028 = vunpack.c.h.b16 %v1767
    %v2029 = vunpack.c.l.b16 %v1768
    %v2030 = vunpack.c.h.b16 %v1768
    %v2031 = vunpack.c.l.b16 %v1769
    %v2032 = vunpack.c.h.b16 %v1769
    %v2033 = vunpack.c.l.b16 %v1770
    %v2034 = vunpack.c.h.b16 %v1770
    %v2035 = vunpack.c.l.b16 %v1771
    %v2036 = vunpack.c.h.b16 %v1771
    %v2037 = vunpack.c.l.b16 %v1772
    %v2038 = vunpack.c.h.b16 %v1772
    %v2039 = vunpack.c.l.b16 %v1773
    %v2040 = vunpack.c.h.b16 %v1773
    %v2041 = vunpack.c.l.b16 %v1774
    %v2042 = vunpack.c.h.b16 %v1774
    %v2043 = vunpack.c.l.b16 %v1775
    %v2044 = vunpack.c.h.b16 %v1775
    %v2045 = vunpack.c.l.b16 %v1776
    %v2046 = vunpack.c.h.b16 %v1776
    %v2047 = vunpack.c.l.b16 %v1777
    %v2048 = vunpack.c.h.b16 %v1777
    %v2049 = vunpack.c.l.b16 %v1778
    %v2050 = vunpack.c.h.b16 %v1778
    %v2051 = vunpack.c.l.b16 %v1779
    %v2052 = vunpack.c.h.b16 %v1779
    %v2053 = vunpack.c.l.b16 %v1780
    %v2054 = vunpack.c.h.b16 %v1780
    %v2055 = vunpack.c.l.b16 %v1781
    %v2056 = vunpack.c.h.b16 %v1781
    %v2057 = vunpack.c.l.b16 %v1782
    %v2058 = vunpack.c.h.b16 %v1782
    %v2059 = vunpack.c.l.b16 %v1783
    %v2060 = vunpack.c.h.b16 %v1783
    %v2061 = vunpack.c.l.b16 %v1784
    %v2062 = vunpack.c.h.b16 %v1784
    %v2063 = vunpack.c.l.b16 %v1785
    %v2064 = vunpack.c.h.b16 %v1785
    %v2065 = vunpack.c.l.b16 %v1786
    %v2066 = vunpack.c.h.b16 %v1786
    %v2067 = vunpack.c.l.b16 %v1787
    %v2068 = vunpack.c.h.b16 %v1787
    %v2069 = vunpack.c.l.b16 %v1788
    %v2070 = vunpack.c.h.b16 %v1788
    %v2071 = vunpack.c.l.b16 %v1789
    %v2072 = vunpack.c.h.b16 %v1789
    %v2073 = vunpack.c.l.b16 %v1790
    %v2074 = vunpack.c.h.b16 %v1790
    %v2075 = vunpack.c.l.b16 %v1791
    %v2076 = vunpack.c.h.b16 %v1791
    %v2077 = vunpack.c.l.b16 %v1792
    %v2078 = vunpack.c.h.b16 %v1792
    %v2079 = vunpack.c.l.b16 %v1793
    %v2080 = vunpack.c.h.b16 %v1793
    %v2081 = vunpack.c.l.b16 %v1794
    %v2082 = vunpack.c.h.b16 %v1794
    %v2083 = vunpack.c.l.b16 %v1795
    %v2084 = vunpack.c.h.b16 %v1795
    %v2085 = vunpack.c.l.b16 %v1796
    %v2086 = vunpack.c.h.b16 %v1796
    %v2087 = vunpack.c.l.b16 %v1797
    %v2088 = vunpack.c.h.b16 %v1797
    %v2089 = vunpack.c.l.b16 %v1798
    %v2090 = vunpack.c.h.b16 %v1798
    %v2091 = vunpack.c.l.b16 %v1799
    %v2092 = vunpack.c.h.b16 %v1799
    %v2093 = vunpack.c.l.b16 %v1800
    %v2094 = vunpack.c.h.b16 %v1800
    %v2095 = vunpack.c.l.b16 %v1801
    %v2096 = vunpack.c.h.b16 %v1801
    %v2097 = vunpack.c.l.b16 %v1802
    %v2098 = vunpack.c.h.b16 %v1802
    %v2099 = vunpack.c.l.b16 %v1803
    %v2100 = vunpack.c.h.b16 %v1803
    %v2101 = vunpack.c.l.b16 %v1804
    %v2102 = vunpack.c.h.b16 %v1804
    %v2103 = vunpack.c.l.b16 %v1805
    %v2104 = vunpack.c.h.b16 %v1805
    %v2105 = vunpack.c.l.b16 %v1806
    %v2106 = vunpack.c.h.b16 %v1806
    %v2107 = vunpack.c.l.b16 %v1807
    %v2108 = vunpack.c.h.b16 %v1807
    %v2109 = vunpack.c.l.b16 %v1808
    %v2110 = vunpack.c.h.b16 %v1808
    %v2111 = vunpack.c.l.b16 %v1809
    %v2112 = vunpack.c.h.b16 %v1809
    %v2113 = vunpack.c.l.b16 %v1810
    %v2114 = vunpack.c.h.b16 %v1810
    %v2115 = vunpack.c.l.b16 %v1811
    %v2116 = vunpack.c.h.b16 %v1811
    %v2117 = vunpack.c.l.b16 %v1812
    %v2118 = vunpack.c.h.b16 %v1812
    %v2119 = vunpack.c.l.b16 %v1813
    %v2120 = vunpack.c.h.b16 %v1813
    %v2121 = vunpack.c.l.b16 %v1814
    %v2122 = vunpack.c.h.b16 %v1814
    %v2123 = vunpack.c.l.b16 %v1815
    %v2124 = vunpack.c.h.b16 %v1815
    %v2125 = vunpack.c.l.b16 %v1816
    %v2126 = vunpack.c.h.b16 %v1816
    %v2127 = vunpack.c.l.b16 %v1817
    %v2128 = vunpack.c.h.b16 %v1817
    %v2129 = vunpack.c.l.b16 %v1818
    %v2130 = vunpack.c.h.b16 %v1818
    %v2131 = vunpack.c.l.b16 %v1819
    %v2132 = vunpack.c.h.b16 %v1819
    %v2133 = vunpack.c.l.b16 %v1820
    %v2134 = vunpack.c.h.b16 %v1820
    %v2135 = vunpack.c.l.b16 %v1821
    %v2136 = vunpack.c.h.b16 %v1821
    %v2137 = vunpack.c.l.b16 %v1822
    %v2138 = vunpack.c.h.b16 %v1822
    %v2139 = vunpack.c.l.b16 %v1823
    %v2140 = vunpack.c.h.b16 %v1823
    %v2141 = vunpack.c.l.b16 %v1824
    %v2142 = vunpack.c.h.b16 %v1824
    %v2143 = vunpack.c.l.b16 %v1825
    %v2144 = vunpack.c.h.b16 %v1825
    %v2145 = vunpack.c.l.b16 %v1826
    %v2146 = vunpack.c.h.b16 %v1826
    %v2147 = vunpack.c.l.b16 %v1827
    %v2148 = vunpack.c.h.b16 %v1827
    %v2149 = vunpack.c.l.b16 %v1828
    %v2150 = vunpack.c.h.b16 %v1828
    %v2151 = vunpack.c.l.b16 %v1829
    %v2152 = vunpack.c.h.b16 %v1829
    %v2153 = vunpack.c.l.b16 %v1830
    %v2154 = vunpack.c.h.b16 %v1830
    %v2155 = vunpack.c.l.b16 %v1831
    %v2156 = vunpack.c.h.b16 %v1831
    %v2157 = vunpack.c.l.b16 %v1832
    %v2158 = vunpack.c.h.b16 %v1832
    %v2159 = vunpack.c.l.b16 %v1833
    %v2160 = vunpack.c.h.b16 %v1833
    %v2161 = vunpack.c.l.b16 %v1834
    %v2162 = vunpack.c.h.b16 %v1834
    %v2163 = vunpack.c.l.b16 %v1835
    %v2164 = vunpack.c.h.b16 %v1835
    %v2165 = vunpack.c.l.b16 %v1836
    %v2166 = vunpack.c.h.b16 %v1836
    %v2167 = vunpack.c.l.b16 %v1837
    %v2168 = vunpack.c.h.b16 %v1837
    %v2169 = vunpack.c.l.b16 %v1838
    %v2170 = vunpack.c.h.b16 %v1838
    %v2171 = vunpack.c.l.b16 %v1839
    %v2172 = vunpack.c.h.b16 %v1839
    %v2173 = vunpack.c.l.b16 %v1840
    %v2174 = vunpack.c.h.b16 %v1840
    %v2175 = vunpack.c.l.b16 %v1841
    %v2176 = vunpack.c.h.b16 %v1841
    %v2177 = vunpack.c.l.b16 %v1842
    %v2178 = vunpack.c.h.b16 %v1842
    %v2179 = vunpack.c.l.b16 %v1843
    %v2180 = vunpack.c.h.b16 %v1843
    %v2181 = vunpack.c.l.b16 %v1844
    %v2182 = vunpack.c.h.b16 %v1844
    %v2183 = vunpack.c.l.b16 %v1845
    %v2184 = vunpack.c.h.b16 %v1845
    %v2185 = vunpack.c.l.b16 %v1846
    %v2186 = vunpack.c.h.b16 %v1846
    %v2187 = vunpack.c.l.b16 %v1847
    %v2188 = vunpack.c.h.b16 %v1847
    %v2189 = vunpack.c.l.b16 %v1848
    %v2190 = vunpack.c.h.b16 %v1848
    %v2191 = vunpack.c.l.b16 %v1849
    %v2192 = vunpack.c.h.b16 %v1849
    %v2193 = vunpack.c.l.b16 %v1850
    %v2194 = vunpack.c.h.b16 %v1850
    %v2195 = vunpack.c.l.b16 %v1851
    %v2196 = vunpack.c.h.b16 %v1851
    %v2197 = vunpack.c.l.b16 %v1852
    %v2198 = vunpack.c.h.b16 %v1852
    %v2199 = vunpack.c.l.b16 %v1853
    %v2200 = vunpack.c.h.b16 %v1853
    %v2201 = vunpack.c.l.b16 %v1854
    %v2202 = vunpack.c.h.b16 %v1854
    %v2203 = vunpack.c.l.b16 %v1855
    %v2204 = vunpack.c.h.b16 %v1855
    %v2205 = vunpack.c.l.b16 %v1856
    %v2206 = vunpack.c.h.b16 %v1856
    %v2207 = vunpack.c.l.b16 %v1857
    %v2208 = vunpack.c.h.b16 %v1857
    %v2209 = vunpack.c.l.b16 %v1858
    %v2210 = vunpack.c.h.b16 %v1858
    %v2211 = vunpack.c.l.b16 %v1859
    %v2212 = vunpack.c.h.b16 %v1859
    %v2213 = vunpack.c.l.b16 %v1860
    %v2214 = vunpack.c.h.b16 %v1860
    %v2215 = vunpack.c.l.b16 %v1861
    %v2216 = vunpack.c.h.b16 %v1861
    %v2217 = vunpack.c.l.b16 %v1862
    %v2218 = vunpack.c.h.b16 %v1862
    %v2219 = vunpack.c.l.b16 %v1863
    %v2220 = vunpack.c.h.b16 %v1863
    %v2221 = vunpack.c.l.b16 %v1864
    %v2222 = vunpack.c.h.b16 %v1864
    %v2223 = vunpack.c.l.b16 %v1865
    %v2224 = vunpack.c.h.b16 %v1865
    %v2225 = vunpack.c.l.b16 %v1866
    %v2226 = vunpack.c.h.b16 %v1866
    %v2227 = vunpack.c.l.b16 %v1867
    %v2228 = vunpack.c.h.b16 %v1867
    %v2229 = vunpack.c.l.b16 %v1868
    %v2230 = vunpack.c.h.b16 %v1868
    %v2231 = vunpack.c.l.b16 %v1869
    %v2232 = vunpack.c.h.b16 %v1869
    %v2233 = vunpack.c.l.b16 %v1870
    %v2234 = vunpack.c.h.b16 %v1870
    %v2235 = vunpack.c.l.b16 %v1871
    %v2236 = vunpack.c.h.b16 %v1871
    %v2237 = vunpack.c.l.b16 %v1872
    %v2238 = vunpack.c.h.b16 %v1872
    %v2239 = vunpack.c.l.b16 %v1873
    %v2240 = vunpack.c.h.b16 %v1873
    %v2241 = vunpack.c.l.b16 %v1874
    %v2242 = vunpack.c.h.b16 %v1874
    %v2243 = vunpack.c.l.b16 %v1875
    %v2244 = vunpack.c.h.b16 %v1875
    %v2245 = vunpack.c.l.b16 %v1876
    %v2246 = vunpack.c.h.b16 %v1876
    %v2247 = vunpack.c.l.b16 %v1877
    %v2248 = vunpack.c.h.b16 %v1877
    %v2249 = vunpack.c.l.b16 %v1878
    %v2250 = vunpack.c.h.b16 %v1878
    %v2251 = vunpack.c.l.b16 %v1879
    %v2252 = vunpack.c.h.b16 %v1879
    %v2253 = vunpack.c.l.b16 %v1880
    %v2254 = vunpack.c.h.b16 %v1880
    %v2255 = vunpack.c.l.b16 %v1881
    %v2256 = vunpack.c.h.b16 %v1881
    %v2257 = vunpack.c.l.b16 %v1882
    %v2258 = vunpack.c.h.b16 %v1882
    %v2259 = vunpack.c.l.b16 %v1883
    %v2260 = vunpack.c.h.b16 %v1883
    %v2261 = vunpack.c.l.b16 %v1884
    %v2262 = vunpack.c.h.b16 %v1884
    %v2263 = vunpack.c.l.b16 %v1885
    %v2264 = vunpack.c.h.b16 %v1885
    %v2265 = vunpack.c.l.b16 %v1886
    %v2266 = vunpack.c.h.b16 %v1886
    %v2267 = vunpack.c.l.b16 %v1887
    %v2268 = vunpack.c.h.b16 %v1887
    %v2269 = vunpack.c.l.b16 %v1888
    %v2270 = vunpack.c.h.b16 %v1888
    %v2271 = vunpack.c.l.b16 %v1889
    %v2272 = vunpack.c.h.b16 %v1889
    %v2273 = vunpack.c.l.b16 %v1890
    %v2274 = vunpack.c.h.b16 %v1890
    %v2275 = vpack.c.b16 %v2023, %v2019
    %v2276 = vpack.c.b16 %v2024, %v2020
    %v2277 = vpack.c.b16 %v2025, %v2021
    %v2278 = vpack.c.b16 %v2026, %v2022
    %v2279 = vpack.c.b16 %v2031, %v2027
    %v2280 = vpack.c.b16 %v2032, %v2028
    %v2281 = vpack.c.b16 %v2033, %v2029
    %v2282 = vpack.c.b16 %v2034, %v2030
    %v2283 = vpack.c.b16 %v2039, %v2035
    %v2284 = vpack.c.b16 %v2040, %v2036
    %v2285 = vpack.c.b16 %v2041, %v2037
    %v2286 = vpack.c.b16 %v2042, %v2038
    %v2287 = vpack.c.b16 %v2047, %v2043
    %v2288 = vpack.c.b16 %v2048, %v2044
    %v2289 = vpack.c.b16 %v2049, %v2045
    %v2290 = vpack.c.b16 %v2050, %v2046
    %v2291 = vpack.c.b16 %v2055, %v2051
    %v2292 = vpack.c.b16 %v2056, %v2052
    %v2293 = vpack.c.b16 %v2057, %v2053
    %v2294 = vpack.c.b16 %v2058, %v2054
    %v2295 = vpack.c.b16 %v2063, %v2059
    %v2296 = vpack.c.b16 %v2064, %v2060
    %v2297 = vpack.c.b16 %v2065, %v2061
    %v2298 = vpack.c.b16 %v2066, %v2062
    %v2299 = vpack.c.b16 %v2071, %v2067
    %v2300 = vpack.c.b16 %v2072, %v2068
    %v2301 = vpack.c.b16 %v2073, %v2069
    %v2302 = vpack.c.b16 %v2074, %v2070
    %v2303 = vpack.c.b16 %v2079, %v2075
    %v2304 = vpack.c.b16 %v2080, %v2076
    %v2305 = vpack.c.b16 %v2081, %v2077
    %v2306 = vpack.c.b16 %v2082, %v2078
    %v2307 = vpack.c.b16 %v2087, %v2083
    %v2308 = vpack.c.b16 %v2088, %v2084
    %v2309 = vpack.c.b16 %v2089, %v2085
    %v2310 = vpack.c.b16 %v2090, %v2086
    %v2311 = vpack.c.b16 %v2095, %v2091
    %v2312 = vpack.c.b16 %v2096, %v2092
    %v2313 = vpack.c.b16 %v2097, %v2093
    %v2314 = vpack.c.b16 %v2098, %v2094
    %v2315 = vpack.c.b16 %v2103, %v2099
    %v2316 = vpack.c.b16 %v2104, %v2100
    %v2317 = vpack.c.b16 %v2105, %v2101
    %v2318 = vpack.c.b16 %v2106, %v2102
    %v2319 = vpack.c.b16 %v2111, %v2107
    %v2320 = vpack.c.b16 %v2112, %v2108
    %v2321 = vpack.c.b16 %v2113, %v2109
    %v2322 = vpack.c.b16 %v2114, %v2110
    %v2323 = vpack.c.b16 %v2119, %v2115
    %v2324 = vpack.c.b16 %v2120, %v2116
    %v2325 = vpack.c.b16 %v2121, %v2117
    %v2326 = vpack.c.b16 %v2122, %v2118
    %v2327 = vpack.c.b16 %v2127, %v2123
    %v2328 = vpack.c.b16 %v2128, %v2124
    %v2329 = vpack.c.b16 %v2129, %v2125
    %v2330 = vpack.c.b16 %v2130, %v2126
    %v2331 = vpack.c.b16 %v2135, %v2131
    %v2332 = vpack.c.b16 %v2136, %v2132
    %v2333 = vpack.c.b16 %v2137, %v2133
    %v2334 = vpack.c.b16 %v2138, %v2134
    %v2335 = vpack.c.b16 %v2143, %v2139
    %v2336 = vpack.c.b16 %v2144, %v2140
    %v2337 = vpack.c.b16 %v2145, %v2141
    %v2338 = vpack.c.b16 %v2146, %v2142
    %v2339 = vpack.c.b16 %v2151, %v2147
    %v2340 = vpack.c.b16 %v2152, %v2148
    %v2341 = vpack.c.b16 %v2153, %v2149
    %v2342 = vpack.c.b16 %v2154, %v2150
    %v2343 = vpack.c.b16 %v2159, %v2155
    %v2344 = vpack.c.b16 %v2160, %v2156
    %v2345 = vpack.c.b16 %v2161, %v2157
    %v2346 = vpack.c.b16 %v2162, %v2158
    %v2347 = vpack.c.b16 %v2167, %v2163
    %v2348 = vpack.c.b16 %v2168, %v2164
    %v2349 = vpack.c.b16 %v2169, %v2165
    %v2350 = vpack.c.b16 %v2170, %v2166
    %v2351 = vpack.c.b16 %v2175, %v2171
    %v2352 = vpack.c.b16 %v2176, %v2172
    %v2353 = vpack.c.b16 %v2177, %v2173
    %v2354 = vpack.c.b16 %v2178, %v2174
    %v2355 = vpack.c.b16 %v2183, %v2179
    %v2356 = vpack.c.b16 %v2184, %v2180
    %v2357 = vpack.c.b16 %v2185, %v2181
    %v2358 = vpack.c.b16 %v2186, %v2182
    %v2359 = vpack.c.b16 %v2191, %v2187
    %v2360 = vpack.c.b16 %v2192, %v2188
    %v2361 = vpack.c.b16 %v2193, %v2189
    %v2362 = vpack.c.b16 %v2194, %v2190
    %v2363 = vpack.c.b16 %v2199, %v2195
    %v2364 = vpack.c.b16 %v2200, %v2196
    %v2365 = vpack.c.b16 %v2201, %v2197
    %v2366 = vpack.c.b16 %v2202, %v2198
    %v2367 = vpack.c.b16 %v2207, %v2203
    %v2368 = vpack.c.b16 %v2208, %v2204
    %v2369 = vpack.c.b16 %v2209, %v2205
    %v2370 = vpack.c.b16 %v2210, %v2206
    %v2371 = vpack.c.b16 %v2215, %v2211
    %v2372 = vpack.c.b16 %v2216, %v2212
    %v2373 = vpack.c.b16 %v2217, %v2213
    %v2374 = vpack.c.b16 %v2218, %v2214
    %v2375 = vpack.c.b16 %v2223, %v2219
    %v2376 = vpack.c.b16 %v2224, %v2220
    %v2377 = vpack.c.b16 %v2225, %v2221
    %v2378 = vpack.c.b16 %v2226, %v2222
    %v2379 = vpack.c.b16 %v2231, %v2227
    %v2380 = vpack.c.b16 %v2232, %v2228
    %v2381 = vpack.c.b16 %v2233, %v2229
    %v2382 = vpack.c.b16 %v2234, %v2230
    %v2383 = vpack.c.b16 %v2239, %v2235
    %v2384 = vpack.c.b16 %v2240, %v2236
    %v2385 = vpack.c.b16 %v2241, %v2237
    %v2386 = vpack.c.b16 %v2242, %v2238
    %v2387 = vpack.c.b16 %v2247, %v2243
    %v2388 = vpack.c.b16 %v2248, %v2244
    %v2389 = vpack.c.b16 %v2249, %v2245
    %v2390 = vpack.c.b16 %v2250, %v2246
    %v2391 = vpack.c.b16 %v2255, %v2251
    %v2392 = vpack.c.b16 %v2256, %v2252
    %v2393 = vpack.c.b16 %v2257, %v2253
    %v2394 = vpack.c.b16 %v2258, %v2254
    %v2395 = vpack.c.b16 %v2263, %v2259
    %v2396 = vpack.c.b16 %v2264, %v2260
    %v2397 = vpack.c.b16 %v2265, %v2261
    %v2398 = vpack.c.b16 %v2266, %v2262
    %v2399 = vpack.c.b16 %v2271, %v2267
    %v2400 = vpack.c.b16 %v2272, %v2268
    %v2401 = vpack.c.b16 %v2273, %v2269
    %v2402 = vpack.c.b16 %v2274, %v2270
    %2531 = vmatprep.subr.bf16.mxu0 %v2304
    %2532 = vmatpush1.bf16.msra.mxu0 %v2303
    %2533 = vmatprep.subr.bf16.mxu0 %v2300
    %2534 = vmatpush1.bf16.msra.mxu0 %v2299
    %2535 = vmatprep.subr.bf16.mxu0 %v2296
    %2536 = vmatpush1.bf16.msra.mxu0 %v2295
    %2537 = vmatprep.subr.bf16.mxu0 %v2292
    %2538 = vmatpush1.bf16.msra.mxu0 %v2291
    %2539 = vmatprep.subr.bf16.mxu0 %v2288
    %2540 = vmatpush1.bf16.msra.mxu0 %v2287
    %2541 = vmatprep.subr.bf16.mxu0 %v2284
    %2542 = vmatpush1.bf16.msra.mxu0 %v2283
    %2543 = vmatprep.subr.bf16.mxu0 %v2280
    %2544 = vmatpush1.bf16.msra.mxu0 %v2279
    %2545 = vmatprep.subr.bf16.mxu0 %v2276
    %2546 = vmatpush1.bf16.msra.mxu0 %v2275
    %2547 = vmatprep.subr.bf16.mxu0 %v2336
    %2548 = vmatpush2.bf16.msra.mxu0 %v2335
    %2549 = vmatprep.subr.bf16.mxu0 %v2332
    %2550 = vmatpush2.bf16.msra.mxu0 %v2331
    %2551 = vmatprep.subr.bf16.mxu0 %v2328
    %2552 = vmatpush2.bf16.msra.mxu0 %v2327
    %2553 = vmatprep.subr.bf16.mxu0 %v2324
    %2554 = vmatpush2.bf16.msra.mxu0 %v2323
    %2555 = vmatprep.subr.bf16.mxu0 %v2320
    %2556 = vmatpush2.bf16.msra.mxu0 %v2319
    %2557 = vmatprep.subr.bf16.mxu0 %v2316
    %2558 = vmatpush2.bf16.msra.mxu0 %v2315
    %2559 = vmatprep.subr.bf16.mxu0 %v2312
    %2560 = vmatpush2.bf16.msra.mxu0 %v2311
    %2561 = vmatprep.subr.bf16.mxu0 %v2308
    %2562 = vmatpush2.bf16.msra.mxu0 %v2307
    %2563 = vmatprep.mubr.bf16.mxu0 %v1760
    %2564 = vmatmul.mubr.bf16.gmra.mxu0 %v1759
    %v2565 = vpop.f32.mrf.mxu0
    %v2566 = vadd.f32 0.0, %v2565
    %v2567 = vpop.f32.mrf.mxu0
    %v2568 = vadd.f32 0.0, %v2567
    %v2569 = vpop.f32.mrf.mxu0
    %v2570 = vadd.f32 0.0, %v2569
    %v2571 = vpop.f32.mrf.mxu0
    %v2572 = vadd.f32 0.0, %v2571
    %2573 = vdwg.mxu0
    %2574 = vmatprep.subr.bf16.mxu0 %v2368
    %2575 = vmatpush1.bf16.msra.mxu0 %v2367
    %2576 = vmatprep.subr.bf16.mxu0 %v2364
    %2577 = vmatpush1.bf16.msra.mxu0 %v2363
    %2578 = vmatprep.subr.bf16.mxu0 %v2360
    %2579 = vmatpush1.bf16.msra.mxu0 %v2359
    %2580 = vmatprep.subr.bf16.mxu0 %v2356
    %2581 = vmatpush1.bf16.msra.mxu0 %v2355
    %2582 = vmatprep.subr.bf16.mxu0 %v2352
    %2583 = vmatpush1.bf16.msra.mxu0 %v2351
    %2584 = vmatprep.subr.bf16.mxu0 %v2348
    %2585 = vmatpush1.bf16.msra.mxu0 %v2347
    %2586 = vmatprep.subr.bf16.mxu0 %v2344
    %2587 = vmatpush1.bf16.msra.mxu0 %v2343
    %2588 = vmatprep.subr.bf16.mxu0 %v2340
    %2589 = vmatpush1.bf16.msra.mxu0 %v2339
    %2590 = vmatprep.subr.bf16.mxu0 %v2400
    %2591 = vmatpush2.bf16.msra.mxu0 %v2399
    %2592 = vmatprep.subr.bf16.mxu0 %v2396
    %2593 = vmatpush2.bf16.msra.mxu0 %v2395
    %2594 = vmatprep.subr.bf16.mxu0 %v2392
    %2595 = vmatpush2.bf16.msra.mxu0 %v2391
    %2596 = vmatprep.subr.bf16.mxu0 %v2388
    %2597 = vmatpush2.bf16.msra.mxu0 %v2387
    %2598 = vmatprep.subr.bf16.mxu0 %v2384
    %2599 = vmatpush2.bf16.msra.mxu0 %v2383
    %2600 = vmatprep.subr.bf16.mxu0 %v2380
    %2601 = vmatpush2.bf16.msra.mxu0 %v2379
    %2602 = vmatprep.subr.bf16.mxu0 %v2376
    %2603 = vmatpush2.bf16.msra.mxu0 %v2375
    %2604 = vmatprep.subr.bf16.mxu0 %v2372
    %2605 = vmatpush2.bf16.msra.mxu0 %v2371
    %2606 = vmatprep.mubr.bf16.mxu0 %v1762
    %2607 = vmatmul.mubr.bf16.gmra.mxu0 %v1761
    %v2608 = vpop.f32.mrf.mxu0
    %v2609 = vadd.f32 %v2566, %v2608
    %v2610 = vpop.f32.mrf.mxu0
    %v2611 = vadd.f32 %v2568, %v2610
    %v2612 = vpop.f32.mrf.mxu0
    %v2613 = vadd.f32 %v2570, %v2612
    %v2614 = vpop.f32.mrf.mxu0
    %v2615 = vadd.f32 %v2572, %v2614
    %2616 = vdwg.mxu0
    %2617 = vmatprep.subr.bf16.mxu0 %v2306
    %2618 = vmatpush1.bf16.msra.mxu0 %v2305
    %2619 = vmatprep.subr.bf16.mxu0 %v2302
    %2620 = vmatpush1.bf16.msra.mxu0 %v2301
    %2621 = vmatprep.subr.bf16.mxu0 %v2298
    %2622 = vmatpush1.bf16.msra.mxu0 %v2297
    %2623 = vmatprep.subr.bf16.mxu0 %v2294
    %2624 = vmatpush1.bf16.msra.mxu0 %v2293
    %2625 = vmatprep.subr.bf16.mxu0 %v2290
    %2626 = vmatpush1.bf16.msra.mxu0 %v2289
    %2627 = vmatprep.subr.bf16.mxu0 %v2286
    %2628 = vmatpush1.bf16.msra.mxu0 %v2285
    %2629 = vmatprep.subr.bf16.mxu0 %v2282
    %2630 = vmatpush1.bf16.msra.mxu0 %v2281
    %2631 = vmatprep.subr.bf16.mxu0 %v2278
    %2632 = vmatpush1.bf16.msra.mxu0 %v2277
    %2633 = vmatprep.subr.bf16.mxu0 %v2338
    %2634 = vmatpush2.bf16.msra.mxu0 %v2337
    %2635 = vmatprep.subr.bf16.mxu0 %v2334
    %2636 = vmatpush2.bf16.msra.mxu0 %v2333
    %2637 = vmatprep.subr.bf16.mxu0 %v2330
    %2638 = vmatpush2.bf16.msra.mxu0 %v2329
    %2639 = vmatprep.subr.bf16.mxu0 %v2326
    %2640 = vmatpush2.bf16.msra.mxu0 %v2325
    %2641 = vmatprep.subr.bf16.mxu0 %v2322
    %2642 = vmatpush2.bf16.msra.mxu0 %v2321
    %2643 = vmatprep.subr.bf16.mxu0 %v2318
    %2644 = vmatpush2.bf16.msra.mxu0 %v2317
    %2645 = vmatprep.subr.bf16.mxu0 %v2314
    %2646 = vmatpush2.bf16.msra.mxu0 %v2313
    %2647 = vmatprep.subr.bf16.mxu0 %v2310
    %2648 = vmatpush2.bf16.msra.mxu0 %v2309
    %2649 = vmatprep.mubr.bf16.mxu0 %v1760
    %2650 = vmatmul.mubr.bf16.gmra.mxu0 %v1759
    %v2651 = vpop.f32.mrf.mxu0
    %v2652 = vadd.f32 0.0, %v2651
    %v2653 = vpop.f32.mrf.mxu0
    %v2654 = vadd.f32 0.0, %v2653
    %v2655 = vpop.f32.mrf.mxu0
    %v2656 = vadd.f32 0.0, %v2655
    %v2657 = vpop.f32.mrf.mxu0
    %v2658 = vadd.f32 0.0, %v2657
    %2659 = vdwg.mxu0
    %2660 = vmatprep.subr.bf16.mxu0 %v2370
    %2661 = vmatpush1.bf16.msra.mxu0 %v2369
    %2662 = vmatprep.subr.bf16.mxu0 %v2366
    %2663 = vmatpush1.bf16.msra.mxu0 %v2365
    %2664 = vmatprep.subr.bf16.mxu0 %v2362
    %2665 = vmatpush1.bf16.msra.mxu0 %v2361
    %2666 = vmatprep.subr.bf16.mxu0 %v2358
    %2667 = vmatpush1.bf16.msra.mxu0 %v2357
    %2668 = vmatprep.subr.bf16.mxu0 %v2354
    %2669 = vmatpush1.bf16.msra.mxu0 %v2353
    %2670 = vmatprep.subr.bf16.mxu0 %v2350
    %2671 = vmatpush1.bf16.msra.mxu0 %v2349
    %2672 = vmatprep.subr.bf16.mxu0 %v2346
    %2673 = vmatpush1.bf16.msra.mxu0 %v2345
    %2674 = vmatprep.subr.bf16.mxu0 %v2342
    %2675 = vmatpush1.bf16.msra.mxu0 %v2341
    %2676 = vmatprep.subr.bf16.mxu0 %v2402
    %2677 = vmatpush2.bf16.msra.mxu0 %v2401
    %2678 = vmatprep.subr.bf16.mxu0 %v2398
    %2679 = vmatpush2.bf16.msra.mxu0 %v2397
    %2680 = vmatprep.subr.bf16.mxu0 %v2394
    %2681 = vmatpush2.bf16.msra.mxu0 %v2393
    %2682 = vmatprep.subr.bf16.mxu0 %v2390
    %2683 = vmatpush2.bf16.msra.mxu0 %v2389
    %2684 = vmatprep.subr.bf16.mxu0 %v2386
    %2685 = vmatpush2.bf16.msra.mxu0 %v2385
    %2686 = vmatprep.subr.bf16.mxu0 %v2382
    %2687 = vmatpush2.bf16.msra.mxu0 %v2381
    %2688 = vmatprep.subr.bf16.mxu0 %v2378
    %2689 = vmatpush2.bf16.msra.mxu0 %v2377
    %2690 = vmatprep.subr.bf16.mxu0 %v2374
    %2691 = vmatpush2.bf16.msra.mxu0 %v2373
    %2692 = vmatprep.mubr.bf16.mxu0 %v1762
    %2693 = vmatmul.mubr.bf16.gmra.mxu0 %v1761
    %v2694 = vpop.f32.mrf.mxu0
    %v2695 = vadd.f32 %v2652, %v2694
    %v2696 = vpop.f32.mrf.mxu0
    %v2697 = vadd.f32 %v2654, %v2696
    %v2698 = vpop.f32.mrf.mxu0
    %v2699 = vadd.f32 %v2656, %v2698
    %v2700 = vpop.f32.mrf.mxu0
    %v2701 = vadd.f32 %v2658, %v2700
    %2702 = vdwg.mxu0
    %v2703 = vpack.c.bf16 %v2613, %v2609
    %v2704 = vpack.c.bf16 %v2615, %v2611
    %v2705 = vpack.c.bf16 %v2699, %v2695
    %v2706 = vpack.c.bf16 %v2701, %v2697
    %v2707 = vld [vmem:[%s4] sm:$0xaa]
    %v2709 = vcombine.high %v2707, %v2707
    %v2711 = vunpack.c.l.s4 1983009808
    %v2712 = vunpack.c.0.s8 %v2711
    %v2713 = vlaneseq
    %v2714 = vshrl.u32 %v2713, 7
    %v2715 = vsub.s32 %v2712, %v2714
    %v2716 = vrot.slane %v2707, %v2715
    %v2718 = vunpack.c.l.s4 1983009808
    %v2719 = vunpack.c.0.s8 %v2718
    %v2720 = vlaneseq
    %v2721 = vshrl.u32 %v2720, 7
    %v2722 = vsub.s32 %v2719, %v2721
    %v2723 = vrot.slane %v2709, %v2722
    %v2724 = vcombine.high %v2716, %v2716
    %v2725 = vcombine.high %v2723, %v2723
    %v2727 = vpack.i.b16 %v2716, %v2716
    %v2729 = vlaneseq
    %v2730 = vshrl.u32 %v2729, 7
    %v2731 = vsub.s32 1, %v2730
    %v2732 = vrot.slane %v2727, %v2731
    %v2734 = vpack.i.b16 %v2724, %v2724
    %v2736 = vlaneseq
    %v2737 = vshrl.u32 %v2736, 7
    %v2738 = vsub.s32 1, %v2737
    %v2739 = vrot.slane %v2734, %v2738
    %v2741 = vpack.i.b16 %v2723, %v2723
    %v2743 = vlaneseq
    %v2744 = vshrl.u32 %v2743, 7
    %v2745 = vsub.s32 1, %v2744
    %v2746 = vrot.slane %v2741, %v2745
    %v2748 = vpack.i.b16 %v2725, %v2725
    %v2750 = vlaneseq
    %v2751 = vshrl.u32 %v2750, 7
    %v2752 = vsub.s32 1, %v2751
    %v2753 = vrot.slane %v2748, %v2752
    %v2754 = vadd.bf16 %v2703, %v2732
    %v2755 = vadd.bf16 %v2704, %v2739
    %v2756 = vadd.bf16 %v2705, %v2746
    %v2757 = vadd.bf16 %v2706, %v2753
    %v2758 = vmul.bf16 %v2754, 1045249613
    %v2759 = vmul.bf16 %v2755, 1045249613
    %v2760 = vmul.bf16 %v2756, 1045249613
    %v2761 = vmul.bf16 %v2757, 1045249613
    %v2762 = vmax.bf16 %v2754, %v2758
    %v2763 = vmax.bf16 %v2755, %v2759
    %v2764 = vmax.bf16 %v2756, %v2760
    %v2765 = vmax.bf16 %v2757, %v2761
    %v2766 = vld [vmem:[#allocation7] sm:$0xf]
    %v2767 = vld [vmem:[#allocation7 + $0x4] sm:$0xf]
    %v2768 = vld [vmem:[#allocation7 + $0x8] sm:$0xf]
    %v2769 = vld [vmem:[#allocation7 + $0xc] sm:$0xf]
    %v2770 = vld [vmem:[#allocation7 + $0x10] sm:$0xf]
    %v2771 = vld [vmem:[#allocation7 + $0x14] sm:$0xf]
    %v2772 = vld [vmem:[#allocation7 + $0x18] sm:$0xf]
    %v2773 = vld [vmem:[#allocation7 + $0x1c] sm:$0xf]
    %v2774 = vld [vmem:[#allocation7 + $0x20] sm:$0xf]
    %v2775 = vld [vmem:[#allocation7 + $0x24] sm:$0xf]
    %v2776 = vld [vmem:[#allocation7 + $0x28] sm:$0xf]
    %v2777 = vld [vmem:[#allocation7 + $0x2c] sm:$0xf]
    %v2778 = vld [vmem:[#allocation7 + $0x30] sm:$0xf]
    %v2779 = vld [vmem:[#allocation7 + $0x34] sm:$0xf]
    %v2780 = vld [vmem:[#allocation7 + $0x38] sm:$0xf]
    %v2781 = vld [vmem:[#allocation7 + $0x3c] sm:$0xf]
    %v2782 = vld [vmem:[#allocation7 + $0x40] sm:$0xf]
    %v2783 = vld [vmem:[#allocation7 + $0x44] sm:$0xf]
    %v2784 = vld [vmem:[#allocation7 + $0x48] sm:$0xf]
    %v2785 = vld [vmem:[#allocation7 + $0x4c] sm:$0xf]
    %v2786 = vld [vmem:[#allocation7 + $0x50] sm:$0xf]
    %v2787 = vld [vmem:[#allocation7 + $0x54] sm:$0xf]
    %v2788 = vld [vmem:[#allocation7 + $0x58] sm:$0xf]
    %v2789 = vld [vmem:[#allocation7 + $0x5c] sm:$0xf]
    %v2790 = vld [vmem:[#allocation7 + $0x60] sm:$0xf]
    %v2791 = vld [vmem:[#allocation7 + $0x64] sm:$0xf]
    %v2792 = vld [vmem:[#allocation7 + $0x68] sm:$0xf]
    %v2793 = vld [vmem:[#allocation7 + $0x6c] sm:$0xf]
    %v2794 = vld [vmem:[#allocation7 + $0x70] sm:$0xf]
    %v2795 = vld [vmem:[#allocation7 + $0x74] sm:$0xf]
    %v2796 = vld [vmem:[#allocation7 + $0x78] sm:$0xf]
    %v2797 = vld [vmem:[#allocation7 + $0x7c] sm:$0xf]
    %v2798 = vld [vmem:[#allocation7 + $0x80] sm:$0xf]
    %v2799 = vld [vmem:[#allocation7 + $0x84] sm:$0xf]
    %v2800 = vld [vmem:[#allocation7 + $0x88] sm:$0xf]
    %v2801 = vld [vmem:[#allocation7 + $0x8c] sm:$0xf]
    %v2802 = vld [vmem:[#allocation7 + $0x90] sm:$0xf]
    %v2803 = vld [vmem:[#allocation7 + $0x94] sm:$0xf]
    %v2804 = vld [vmem:[#allocation7 + $0x98] sm:$0xf]
    %v2805 = vld [vmem:[#allocation7 + $0x9c] sm:$0xf]
    %v2806 = vld [vmem:[#allocation7 + $0xa0] sm:$0xf]
    %v2807 = vld [vmem:[#allocation7 + $0xa4] sm:$0xf]
    %v2808 = vld [vmem:[#allocation7 + $0xa8] sm:$0xf]
    %v2809 = vld [vmem:[#allocation7 + $0xac] sm:$0xf]
    %v2810 = vld [vmem:[#allocation7 + $0xb0] sm:$0xf]
    %v2811 = vld [vmem:[#allocation7 + $0xb4] sm:$0xf]
    %v2812 = vld [vmem:[#allocation7 + $0xb8] sm:$0xf]
    %v2813 = vld [vmem:[#allocation7 + $0xbc] sm:$0xf]
    %v2814 = vld [vmem:[#allocation7 + $0xc0] sm:$0xf]
    %v2815 = vld [vmem:[#allocation7 + $0xc4] sm:$0xf]
    %v2816 = vld [vmem:[#allocation7 + $0xc8] sm:$0xf]
    %v2817 = vld [vmem:[#allocation7 + $0xcc] sm:$0xf]
    %v2818 = vld [vmem:[#allocation7 + $0xd0] sm:$0xf]
    %v2819 = vld [vmem:[#allocation7 + $0xd4] sm:$0xf]
    %v2820 = vld [vmem:[#allocation7 + $0xd8] sm:$0xf]
    %v2821 = vld [vmem:[#allocation7 + $0xdc] sm:$0xf]
    %v2822 = vld [vmem:[#allocation7 + $0xe0] sm:$0xf]
    %v2823 = vld [vmem:[#allocation7 + $0xe4] sm:$0xf]
    %v2824 = vld [vmem:[#allocation7 + $0xe8] sm:$0xf]
    %v2825 = vld [vmem:[#allocation7 + $0xec] sm:$0xf]
    %v2826 = vld [vmem:[#allocation7 + $0xf0] sm:$0xf]
    %v2827 = vld [vmem:[#allocation7 + $0xf4] sm:$0xf]
    %v2828 = vld [vmem:[#allocation7 + $0xf8] sm:$0xf]
    %v2829 = vld [vmem:[#allocation7 + $0xfc] sm:$0xf]
    %v2830 = vld [vmem:[%s4] sm:$0x2]
    %v2831 = vunpack.c.l.bf16 %v2830
    %v2832 = vlaneseq
    %v2833 = vshrl.u32 %v2832, 7
    %v2834 = vsub.s32 3, %v2833
    %v2835 = vrot.slane %v2831, %v2834
    %v2900 = vunpack.c.l.b16 %v2766
    %v2901 = vunpack.c.l.b16 %v2767
    %v2902 = vunpack.c.l.b16 %v2768
    %v2903 = vunpack.c.l.b16 %v2769
    %v2904 = vunpack.c.l.b16 %v2770
    %v2905 = vunpack.c.l.b16 %v2771
    %v2906 = vunpack.c.l.b16 %v2772
    %v2907 = vunpack.c.l.b16 %v2773
    %v2908 = vunpack.c.l.b16 %v2774
    %v2909 = vunpack.c.l.b16 %v2775
    %v2910 = vunpack.c.l.b16 %v2776
    %v2911 = vunpack.c.l.b16 %v2777
    %v2912 = vunpack.c.l.b16 %v2778
    %v2913 = vunpack.c.l.b16 %v2779
    %v2914 = vunpack.c.l.b16 %v2780
    %v2915 = vunpack.c.l.b16 %v2781
    %v2916 = vunpack.c.l.b16 %v2782
    %v2917 = vunpack.c.l.b16 %v2783
    %v2918 = vunpack.c.l.b16 %v2784
    %v2919 = vunpack.c.l.b16 %v2785
    %v2920 = vunpack.c.l.b16 %v2786
    %v2921 = vunpack.c.l.b16 %v2787
    %v2922 = vunpack.c.l.b16 %v2788
    %v2923 = vunpack.c.l.b16 %v2789
    %v2924 = vunpack.c.l.b16 %v2790
    %v2925 = vunpack.c.l.b16 %v2791
    %v2926 = vunpack.c.l.b16 %v2792
    %v2927 = vunpack.c.l.b16 %v2793
    %v2928 = vunpack.c.l.b16 %v2794
    %v2929 = vunpack.c.l.b16 %v2795
    %v2930 = vunpack.c.l.b16 %v2796
    %v2931 = vunpack.c.l.b16 %v2797
    %v2932 = vunpack.c.l.b16 %v2798
    %v2933 = vunpack.c.l.b16 %v2799
    %v2934 = vunpack.c.l.b16 %v2800
    %v2935 = vunpack.c.l.b16 %v2801
    %v2936 = vunpack.c.l.b16 %v2802
    %v2937 = vunpack.c.l.b16 %v2803
    %v2938 = vunpack.c.l.b16 %v2804
    %v2939 = vunpack.c.l.b16 %v2805
    %v2940 = vunpack.c.l.b16 %v2806
    %v2941 = vunpack.c.l.b16 %v2807
    %v2942 = vunpack.c.l.b16 %v2808
    %v2943 = vunpack.c.l.b16 %v2809
    %v2944 = vunpack.c.l.b16 %v2810
    %v2945 = vunpack.c.l.b16 %v2811
    %v2946 = vunpack.c.l.b16 %v2812
    %v2947 = vunpack.c.l.b16 %v2813
    %v2948 = vunpack.c.l.b16 %v2814
    %v2949 = vunpack.c.l.b16 %v2815
    %v2950 = vunpack.c.l.b16 %v2816
    %v2951 = vunpack.c.l.b16 %v2817
    %v2952 = vunpack.c.l.b16 %v2818
    %v2953 = vunpack.c.l.b16 %v2819
    %v2954 = vunpack.c.l.b16 %v2820
    %v2955 = vunpack.c.l.b16 %v2821
    %v2956 = vunpack.c.l.b16 %v2822
    %v2957 = vunpack.c.l.b16 %v2823
    %v2958 = vunpack.c.l.b16 %v2824
    %v2959 = vunpack.c.l.b16 %v2825
    %v2960 = vunpack.c.l.b16 %v2826
    %v2961 = vunpack.c.l.b16 %v2827
    %v2962 = vunpack.c.l.b16 %v2828
    %v2963 = vunpack.c.l.b16 %v2829
    %v2964 = vpack.c.b16 %v2901, %v2900
    %v2965 = vpack.c.b16 %v2903, %v2902
    %v2966 = vpack.c.b16 %v2905, %v2904
    %v2967 = vpack.c.b16 %v2907, %v2906
    %v2968 = vpack.c.b16 %v2909, %v2908
    %v2969 = vpack.c.b16 %v2911, %v2910
    %v2970 = vpack.c.b16 %v2913, %v2912
    %v2971 = vpack.c.b16 %v2915, %v2914
    %v2972 = vpack.c.b16 %v2917, %v2916
    %v2973 = vpack.c.b16 %v2919, %v2918
    %v2974 = vpack.c.b16 %v2921, %v2920
    %v2975 = vpack.c.b16 %v2923, %v2922
    %v2976 = vpack.c.b16 %v2925, %v2924
    %v2977 = vpack.c.b16 %v2927, %v2926
    %v2978 = vpack.c.b16 %v2929, %v2928
    %v2979 = vpack.c.b16 %v2931, %v2930
    %v2980 = vpack.c.b16 %v2933, %v2932
    %v2981 = vpack.c.b16 %v2935, %v2934
    %v2982 = vpack.c.b16 %v2937, %v2936
    %v2983 = vpack.c.b16 %v2939, %v2938
    %v2984 = vpack.c.b16 %v2941, %v2940
    %v2985 = vpack.c.b16 %v2943, %v2942
    %v2986 = vpack.c.b16 %v2945, %v2944
    %v2987 = vpack.c.b16 %v2947, %v2946
    %v2988 = vpack.c.b16 %v2949, %v2948
    %v2989 = vpack.c.b16 %v2951, %v2950
    %v2990 = vpack.c.b16 %v2953, %v2952
    %v2991 = vpack.c.b16 %v2955, %v2954
    %v2992 = vpack.c.b16 %v2957, %v2956
    %v2993 = vpack.c.b16 %v2959, %v2958
    %v2994 = vpack.c.b16 %v2961, %v2960
    %v2995 = vpack.c.b16 %v2963, %v2962
    %3028 = vmatprep.subr.bf16.mxu0 0
    %3029 = vmatpush1.bf16.msra.mxu0 %v2971
    %3030 = vmatprep.subr.bf16.mxu0 0
    %3031 = vmatpush1.bf16.msra.mxu0 %v2970
    %3032 = vmatprep.subr.bf16.mxu0 0
    %3033 = vmatpush1.bf16.msra.mxu0 %v2969
    %3034 = vmatprep.subr.bf16.mxu0 0
    %3035 = vmatpush1.bf16.msra.mxu0 %v2968
    %3036 = vmatprep.subr.bf16.mxu0 0
    %3037 = vmatpush1.bf16.msra.mxu0 %v2967
    %3038 = vmatprep.subr.bf16.mxu0 0
    %3039 = vmatpush1.bf16.msra.mxu0 %v2966
    %3040 = vmatprep.subr.bf16.mxu0 0
    %3041 = vmatpush1.bf16.msra.mxu0 %v2965
    %3042 = vmatprep.subr.bf16.mxu0 0
    %3043 = vmatpush1.bf16.msra.mxu0 %v2964
    %3044 = vmatprep.subr.bf16.mxu0 0
    %3045 = vmatpush2.bf16.msra.mxu0 %v2979
    %3046 = vmatprep.subr.bf16.mxu0 0
    %3047 = vmatpush2.bf16.msra.mxu0 %v2978
    %3048 = vmatprep.subr.bf16.mxu0 0
    %3049 = vmatpush2.bf16.msra.mxu0 %v2977
    %3050 = vmatprep.subr.bf16.mxu0 0
    %3051 = vmatpush2.bf16.msra.mxu0 %v2976
    %3052 = vmatprep.subr.bf16.mxu0 0
    %3053 = vmatpush2.bf16.msra.mxu0 %v2975
    %3054 = vmatprep.subr.bf16.mxu0 0
    %3055 = vmatpush2.bf16.msra.mxu0 %v2974
    %3056 = vmatprep.subr.bf16.mxu0 0
    %3057 = vmatpush2.bf16.msra.mxu0 %v2973
    %3058 = vmatprep.subr.bf16.mxu0 0
    %3059 = vmatpush2.bf16.msra.mxu0 %v2972
    %3060 = vmatprep.mubr.bf16.mxu0 %v2763
    %3061 = vmatmul.mubr.bf16.gmra.mxu0 %v2762
    %v3062 = vpop.f32.mrf.mxu0
    %v3063 = vadd.f32 %v2835, %v3062
    %v3064 = vpop.f32.mrf.mxu0
    %v3065 = vpop.f32.mrf.mxu0
    %v3066 = vadd.f32 %v2835, %v3065
    %v3067 = vpop.f32.mrf.mxu0
    %3068 = vdwg.mxu0
    %3069 = vmatprep.subr.bf16.mxu0 0
    %3070 = vmatpush1.bf16.msra.mxu0 %v2987
    %3071 = vmatprep.subr.bf16.mxu0 0
    %3072 = vmatpush1.bf16.msra.mxu0 %v2986
    %3073 = vmatprep.subr.bf16.mxu0 0
    %3074 = vmatpush1.bf16.msra.mxu0 %v2985
    %3075 = vmatprep.subr.bf16.mxu0 0
    %3076 = vmatpush1.bf16.msra.mxu0 %v2984
    %3077 = vmatprep.subr.bf16.mxu0 0
    %3078 = vmatpush1.bf16.msra.mxu0 %v2983
    %3079 = vmatprep.subr.bf16.mxu0 0
    %3080 = vmatpush1.bf16.msra.mxu0 %v2982
    %3081 = vmatprep.subr.bf16.mxu0 0
    %3082 = vmatpush1.bf16.msra.mxu0 %v2981
    %3083 = vmatprep.subr.bf16.mxu0 0
    %3084 = vmatpush1.bf16.msra.mxu0 %v2980
    %3085 = vmatprep.subr.bf16.mxu0 0
    %3086 = vmatpush2.bf16.msra.mxu0 %v2995
    %3087 = vmatprep.subr.bf16.mxu0 0
    %3088 = vmatpush2.bf16.msra.mxu0 %v2994
    %3089 = vmatprep.subr.bf16.mxu0 0
    %3090 = vmatpush2.bf16.msra.mxu0 %v2993
    %3091 = vmatprep.subr.bf16.mxu0 0
    %3092 = vmatpush2.bf16.msra.mxu0 %v2992
    %3093 = vmatprep.subr.bf16.mxu0 0
    %3094 = vmatpush2.bf16.msra.mxu0 %v2991
    %3095 = vmatprep.subr.bf16.mxu0 0
    %3096 = vmatpush2.bf16.msra.mxu0 %v2990
    %3097 = vmatprep.subr.bf16.mxu0 0
    %3098 = vmatpush2.bf16.msra.mxu0 %v2989
    %3099 = vmatprep.subr.bf16.mxu0 0
    %3100 = vmatpush2.bf16.msra.mxu0 %v2988
    %3101 = vmatprep.mubr.bf16.mxu0 %v2765
    %3102 = vmatmul.mubr.bf16.gmra.mxu0 %v2764
    %v3103 = vpop.f32.mrf.mxu0
    %v3104 = vadd.f32 %v3063, %v3103
    %v3105 = vpop.f32.mrf.mxu0
    %v3106 = vpop.f32.mrf.mxu0
    %v3107 = vadd.f32 %v3066, %v3106
    %v3108 = vpop.f32.mrf.mxu0
    %3109 = vdwg.mxu0
    %3110 = vst [vmem:[%s8] sm:$0xff] %v3104
    %3111 = vst [vmem:[%s8 + $0x8] sm:$0xff] %v3107
    // Predicated region
    $region50: #{discriminator_forward.1} parent=1 // pred_check
      _
    $region51: #{discriminator_forward.1} parent=1 // pred_check_branch
      %3113 = sbr.rel (0) target = $region53
    $region52: #{discriminator_forward.1} parent=1 // pred_region
      _
    $region53: #{discriminator_forward.1} parent=1 // pred_fallthru
      _
    // Predicated region
    $region54: #{discriminator_forward.1} parent=1 // pred_check
      _
    $region55: #{discriminator_forward.1} parent=1 // pred_check_branch
      %3115 = sbr.rel (0) target = $region57
    $region56: #{discriminator_forward.1} parent=1 // pred_region
      _
    $region57: #{discriminator_forward.1} parent=1 // pred_fallthru
      _
    %3116 = vsyncpa [#allocation3], 1
    %3117 = vsyncpa [#allocation5], 1
    %3118 = vsyncpa [#allocation8], 1

</llo_original>
